<compile_context>
chip_gen: v7x
topology: tpu7x:2x2x1
jax: 0.10.0
libtpu: 0.0.40
codegen_flags: <defaults>
</compile_context>

<pallas_src>
import functools
import math

import jax
import jax.numpy as jnp
from jax.experimental import pallas as pl
from jax.experimental.pallas import tpu as pltpu


def _encoder_layer_kernel(
    xq_ref, xkv_ref,
    wq_ref, bq_ref, wk_ref, bk_ref, wv_ref, bv_ref,
    wo_ref, bo_ref,
    w1_ref, b1_ref, w2_ref, b2_ref,
    g1_ref, be1_ref, g2_ref, be2_ref,
    o_ref,
    *, nhead, eps=1e-5,
):
  H = nhead
  Tq = xq_ref.shape[1]
  S = xkv_ref.shape[1]
  D = xq_ref.shape[2]
  Dh = D // H

  xq = xq_ref[0]                                   # (Tq, D) f32 — query slab / residual stream
  xkv = xkv_ref[0]                                 # (S, D)  f32 — full sequence for K/V
  xq_b = xq.astype(jnp.bfloat16)
  xkv_b = xkv.astype(jnp.bfloat16)

  # ---- Q/K/V projections: bf16 operands, f32 accumulate, pre-transposed weights.
  # (1/sqrt(Dh) is folded into wq/bq in the wrapper.)
  q = jnp.dot(xq_b, wq_ref[...], preferred_element_type=jnp.float32) + bq_ref[...]   # (Tq, D)
  k = jnp.dot(xkv_b, wk_ref[...], preferred_element_type=jnp.float32) + bk_ref[...]  # (S, D)
  v = jnp.dot(xkv_b, wv_ref[...], preferred_element_type=jnp.float32) + bv_ref[...]  # (S, D)
  q = q.astype(jnp.bfloat16)
  k = k.astype(jnp.bfloat16)
  v = v.astype(jnp.bfloat16)

  # ---- split heads along a new leading (untiled) axis: static lane slices + stack.
  qh = jnp.stack([q[:, h * Dh:(h + 1) * Dh] for h in range(H)], axis=0)   # (H, Tq, Dh)
  kh = jnp.stack([k[:, h * Dh:(h + 1) * Dh] for h in range(H)], axis=0)   # (H, S, Dh)
  vh = jnp.stack([v[:, h * Dh:(h + 1) * Dh] for h in range(H)], axis=0)   # (H, S, Dh)

  # ---- attention: batched-head matmuls on the MXU, softmax in f32 on VPU/EUP.
  s = jnp.einsum('hqd,hkd->hqk', qh, kh, preferred_element_type=jnp.float32)  # (H, Tq, S)
  s = s - jnp.max(s, axis=-1, keepdims=True)
  p = jnp.exp(s)
  denom = jnp.sum(p, axis=-1, keepdims=True)                                  # (H, Tq, 1)
  ctx = jnp.einsum('hqk,hkd->hqd', p.astype(jnp.bfloat16), vh,
                   preferred_element_type=jnp.float32)                        # (H, Tq, Dh)
  ctx = ctx * pl.reciprocal(denom, approx=True)

  # ---- output projection with per-head weight slabs (H, Dh, D); sum over heads
  # replaces the lane-dim concatenate of the previous version.
  attn = jnp.einsum('hqd,hdo->hqo', ctx.astype(jnp.bfloat16), wo_ref[...],
                    preferred_element_type=jnp.float32)                       # (H, Tq, D)
  attn = jnp.sum(attn, axis=0) + bo_ref[...]                                  # (Tq, D)

  # ---- residual + LayerNorm 1 (f32 — v5e has no bf16 VPU)
  h1 = xq + attn
  mu = jnp.mean(h1, axis=-1, keepdims=True)
  var = jnp.mean(jnp.square(h1 - mu), axis=-1, keepdims=True)
  h1 = (h1 - mu) * jax.lax.rsqrt(var + eps) * g1_ref[...] + be1_ref[...]

  # ---- feed-forward: linear1 -> relu -> linear2 (bf16 MXU operands, f32 accum)
  ff = jnp.dot(h1.astype(jnp.bfloat16), w1_ref[...],
               preferred_element_type=jnp.float32) + b1_ref[...]              # (Tq, F)
  ff = jnp.maximum(ff, 0.0)
  ff = jnp.dot(ff.astype(jnp.bfloat16), w2_ref[...],
               preferred_element_type=jnp.float32) + b2_ref[...]              # (Tq, D)

  # ---- residual + LayerNorm 2
  h2 = h1 + ff
  mu2 = jnp.mean(h2, axis=-1, keepdims=True)
  var2 = jnp.mean(jnp.square(h2 - mu2), axis=-1, keepdims=True)
  out = (h2 - mu2) * jax.lax.rsqrt(var2 + eps) * g2_ref[...] + be2_ref[...]

  o_ref[0] = out.astype(o_ref.dtype)


def transformer_encoder_layer(x, params, *, d_model, nhead, q_tile=256):
  """x: (batch, seq, d_model) float32 -> (batch, seq, d_model) float32."""
  B, S, D = x.shape
  assert D == d_model and D % nhead == 0
  H = nhead
  Dh = D // H
  F = params["w1"].shape[0]
  scale = 1.0 / math.sqrt(Dh)
  Tq = min(q_tile, S)
  assert S % Tq == 0, "seq length must be divisible by the query tile"
  n_q = S // Tq

  bf16 = jnp.bfloat16
  win, bin_ = params["win"], params["bin"]
  # Pre-transposed, pre-scaled, bf16 MXU operands (done once in the wrapper).
  wq = (win[:D].T * scale).astype(bf16)            # (D, D)
  wk = win[D:2 * D].T.astype(bf16)                 # (D, D)
  wv = win[2 * D:].T.astype(bf16)                  # (D, D)
  bq = bin_[:, :D] * scale                         # (1, D)  f32 (added post-accumulate)
  bk = bin_[:, D:2 * D]
  bv = bin_[:, 2 * D:]
  wo = params["wo"].T.reshape(H, Dh, D).astype(bf16)   # per-head output projection
  w1 = params["w1"].T.astype(bf16)                 # (D, F)
  w2 = params["w2"].T.astype(bf16)                 # (F, D)

  weights = [
      wq, bq, wk, bk, wv, bv, wo, params["bo"],
      w1, params["b1"], w2, params["b2"],
      params["g1"], params["be1"], params["g2"], params["be2"],
  ]

  xq_spec = pl.BlockSpec((1, Tq, D), lambda b, i: (b, i, 0))
  # TODO(synk): K/V projection of the full sequence is recomputed per query tile;
  # for very long S a two-pass (precompute K/V) variant would remove that.
  xkv_spec = pl.BlockSpec((1, S, D), lambda b, i: (b, 0, 0))
  # Grid-invariant operands: single-buffered, resident in VMEM once.
  w_specs = [
      pl.BlockSpec(w.shape, lambda b, i, n=w.ndim: (0,) * n,
                   pipeline_mode=pl.Buffered(1))
      for w in weights
  ]

  # Advisory cost estimate for XLA's scheduler.
  per_step_flops = (2 * D * D * (2 * Tq + 2 * S)      # q/k/v/out projections
                    + 4 * Tq * S * D                  # scores + p@v
                    + 4 * Tq * D * F)                 # FFN
  flops = B * n_q * per_step_flops
  transcendentals = B * n_q * (H * Tq * S + 2 * Tq)
  weight_bytes = sum(int(w.size) * w.dtype.itemsize for w in weights)
  bytes_accessed = B * n_q * (4 * (2 * Tq * D + S * D) + weight_bytes)
  cost = pl.CostEstimate(flops=int(flops), transcendentals=int(transcendentals),
                         bytes_accessed=int(bytes_accessed))

  kernel = functools.partial(_encoder_layer_kernel, nhead=nhead)

  return pl.pallas_call(
      kernel,
      out_shape=jax.ShapeDtypeStruct((B, S, D), jnp.float32),
      grid=(B, n_q),
      in_specs=[xq_spec, xkv_spec] + w_specs,
      out_specs=pl.BlockSpec((1, Tq, D), lambda b, i: (b, i, 0)),
      compiler_params=pltpu.CompilerParams(
          dimension_semantics=("parallel", "parallel"),
          vmem_limit_bytes=48 * 1024 * 1024,   # fits under v7x's 64 MiB physical VMEM
      ),
      cost_estimate=cost,
  )(x, x, *weights)


def _reference(x, p, *, d_model, nhead):
  """Pure-JAX (f32) reference of the same eval-mode forward pass."""
  B, S, D = x.shape
  H = nhead
  Dh = D // H
  qkv = jnp.einsum('bsd,ed->bse', x, p["win"]) + p["bin"][0]
  q, k, v = qkv[..., :D], qkv[..., D:2 * D], qkv[..., 2 * D:]
  q = q.reshape(B, S, H, Dh).transpose(0, 2, 1, 3) / math.sqrt(Dh)
  k = k.reshape(B, S, H, Dh).transpose(0, 2, 1, 3)
  v = v.reshape(B, S, H, Dh).transpose(0, 2, 1, 3)
  a = jax.nn.softmax(jnp.einsum('bhqd,bhkd->bhqk', q, k), axis=-1)
  ctx = jnp.einsum('bhqk,bhkd->bhqd', a, v).transpose(0, 2, 1, 3).reshape(B, S, D)
  attn = ctx @ p["wo"].T + p["bo"][0]
  h1 = x + attn
  h1 = (h1 - h1.mean(-1, keepdims=True)) / jnp.sqrt(h1.var(-1, keepdims=True) + 1e-5)
  h1 = h1 * p["g1"][0] + p["be1"][0]
  ff = jnp.maximum(h1 @ p["w1"].T + p["b1"][0], 0.0) @ p["w2"].T + p["b2"][0]
  h2 = h1 + ff
  h2 = (h2 - h2.mean(-1, keepdims=True)) / jnp.sqrt(h2.var(-1, keepdims=True) + 1e-5)
  return h2 * p["g2"][0] + p["be2"][0]


def init_params(key, d_model, nhead, dim_feedforward):
  D, F = d_model, dim_feedforward
  ks = jax.random.split(key, 8)
  s = 0.05
  return {
      "win": s * jax.random.normal(ks[0], (3 * D, D), jnp.float32),
      "bin": s * jax.random.normal(ks[1], (1, 3 * D), jnp.float32),
      "wo":  s * jax.random.normal(ks[2], (D, D), jnp.float32),
      "bo":  s * jax.random.normal(ks[3], (1, D), jnp.float32),
      "w1":  s * jax.random.normal(ks[4], (F, D), jnp.float32),
      "b1":  s * jax.random.normal(ks[5], (1, F), jnp.float32),
      "w2":  s * jax.random.normal(ks[6], (D, F), jnp.float32),
      "b2":  s * jax.random.normal(ks[7], (1, D), jnp.float32),
      "g1":  jnp.ones((1, D), jnp.float32),
      "be1": jnp.zeros((1, D), jnp.float32),
      "g2":  jnp.ones((1, D), jnp.float32),
      "be2": jnp.zeros((1, D), jnp.float32),
  }


if __name__ == "__main__":
  # TODO(synk): src_mask / src_key_padding_mask are not supported (the PyTorch
  # call passes None for both); dropout layers are identity (eval mode).
  B, S, d_model, nhead, dim_ff = 2, 8, 32, 4, 64
  key = jax.random.PRNGKey(0)
  kx, kp = jax.random.split(key)
  x = jax.random.normal(kx, (B, S, d_model), jnp.float32)
  params = init_params(kp, d_model, nhead, dim_ff)

  out = transformer_encoder_layer(x, params, d_model=d_model, nhead=nhead)
  out = jax.block_until_ready(out)

  ref = _reference(x, params, d_model=d_model, nhead=nhead)
  assert out.shape == (B, S, d_model)
  # bf16 MXU operands vs. f32 reference -> loosened tolerance.
  err = float(jnp.max(jnp.abs(out - ref)))
  assert jnp.allclose(out, ref, atol=2e-2, rtol=2e-2), f"max abs err {err}"
  print("KERNEL_OK")
</pallas_src>

<mosaic_0001>
module attributes {stable_mosaic.version = 11 : i64} {
  func.func @_encoder_layer_kernel(%arg0: i32, %arg1: i32, %arg2: memref<1x8x32xf32, #tpu.memory_space<vmem>>, %arg3: memref<1x8x32xf32, #tpu.memory_space<vmem>>, %arg4: memref<32x32xbf16, #tpu.memory_space<vmem>>, %arg5: memref<1x32xf32, #tpu.memory_space<vmem>>, %arg6: memref<32x32xbf16, #tpu.memory_space<vmem>>, %arg7: memref<1x32xf32, #tpu.memory_space<vmem>>, %arg8: memref<32x32xbf16, #tpu.memory_space<vmem>>, %arg9: memref<1x32xf32, #tpu.memory_space<vmem>>, %arg10: memref<4x8x32xbf16, #tpu.memory_space<vmem>>, %arg11: memref<1x32xf32, #tpu.memory_space<vmem>>, %arg12: memref<32x64xbf16, #tpu.memory_space<vmem>>, %arg13: memref<1x64xf32, #tpu.memory_space<vmem>>, %arg14: memref<64x32xbf16, #tpu.memory_space<vmem>>, %arg15: memref<1x32xf32, #tpu.memory_space<vmem>>, %arg16: memref<1x32xf32, #tpu.memory_space<vmem>>, %arg17: memref<1x32xf32, #tpu.memory_space<vmem>>, %arg18: memref<1x32xf32, #tpu.memory_space<vmem>>, %arg19: memref<1x32xf32, #tpu.memory_space<vmem>>, %arg20: memref<1x8x32xf32, #tpu.memory_space<vmem>>) attributes {dimension_semantics = [#tpu.dimension_semantics<parallel>, #tpu.dimension_semantics<parallel>], iteration_bounds = array<i64: 2, 1>, scalar_prefetch = 0 : i64, scratch_operands = 0 : i64, tpu.core_type = #tpu.core_type<tc>, window_params = [{transform_indices = @transform_0, window_bounds = array<i64: 1, 8, 32>}, {transform_indices = @transform_1, window_bounds = array<i64: 1, 8, 32>}, {pipeline_mode = #tpu.pipeline_mode<synchronous>, transform_indices = @transform_2, window_bounds = array<i64: 32, 32>}, {pipeline_mode = #tpu.pipeline_mode<synchronous>, transform_indices = @transform_3, window_bounds = array<i64: 1, 32>}, {pipeline_mode = #tpu.pipeline_mode<synchronous>, transform_indices = @transform_4, window_bounds = array<i64: 32, 32>}, {pipeline_mode = #tpu.pipeline_mode<synchronous>, transform_indices = @transform_5, window_bounds = array<i64: 1, 32>}, {pipeline_mode = #tpu.pipeline_mode<synchronous>, transform_indices = @transform_6, window_bounds = array<i64: 32, 32>}, {pipeline_mode = #tpu.pipeline_mode<synchronous>, transform_indices = @transform_7, window_bounds = array<i64: 1, 32>}, {pipeline_mode = #tpu.pipeline_mode<synchronous>, transform_indices = @transform_8, window_bounds = array<i64: 4, 8, 32>}, {pipeline_mode = #tpu.pipeline_mode<synchronous>, transform_indices = @transform_9, window_bounds = array<i64: 1, 32>}, {pipeline_mode = #tpu.pipeline_mode<synchronous>, transform_indices = @transform_10, window_bounds = array<i64: 32, 64>}, {pipeline_mode = #tpu.pipeline_mode<synchronous>, transform_indices = @transform_11, window_bounds = array<i64: 1, 64>}, {pipeline_mode = #tpu.pipeline_mode<synchronous>, transform_indices = @transform_12, window_bounds = array<i64: 64, 32>}, {pipeline_mode = #tpu.pipeline_mode<synchronous>, transform_indices = @transform_13, window_bounds = array<i64: 1, 32>}, {pipeline_mode = #tpu.pipeline_mode<synchronous>, transform_indices = @transform_14, window_bounds = array<i64: 1, 32>}, {pipeline_mode = #tpu.pipeline_mode<synchronous>, transform_indices = @transform_15, window_bounds = array<i64: 1, 32>}, {pipeline_mode = #tpu.pipeline_mode<synchronous>, transform_indices = @transform_16, window_bounds = array<i64: 1, 32>}, {pipeline_mode = #tpu.pipeline_mode<synchronous>, transform_indices = @transform_17, window_bounds = array<i64: 1, 32>}, {transform_indices = @transform_18, window_bounds = array<i64: 1, 8, 32>}]} {
    %c0 = arith.constant 0 : index
    %c0_0 = arith.constant 0 : index
    %c0_1 = arith.constant 0 : index
    %0 = vector.load %arg2[%c0, %c0_0, %c0_1] : memref<1x8x32xf32, #tpu.memory_space<vmem>>, vector<1x8x32xf32>
    %1 = vector.shape_cast %0 : vector<1x8x32xf32> to vector<8x32xf32>
    %c0_2 = arith.constant 0 : index
    %c0_3 = arith.constant 0 : index
    %c0_4 = arith.constant 0 : index
    %2 = vector.load %arg3[%c0_2, %c0_3, %c0_4] : memref<1x8x32xf32, #tpu.memory_space<vmem>>, vector<1x8x32xf32>
    %3 = vector.shape_cast %2 : vector<1x8x32xf32> to vector<8x32xf32>
    %4 = arith.truncf %1 : vector<8x32xf32> to vector<8x32xbf16>
    %5 = arith.truncf %3 : vector<8x32xf32> to vector<8x32xbf16>
    %c0_5 = arith.constant 0 : index
    %c0_6 = arith.constant 0 : index
    %6 = vector.load %arg4[%c0_5, %c0_6] : memref<32x32xbf16, #tpu.memory_space<vmem>>, vector<32x32xbf16>
    %cst = arith.constant dense<0.000000e+00> : vector<8x32xf32>
    %7 = tpu.matmul %4, %6, %cst {dimension_numbers = #tpu.dot_dimension_numbers<[1], [0], [0], [1], [0, 0, 1, 1], [], []>} : vector<8x32xbf16>, vector<32x32xbf16>, vector<8x32xf32> -> vector<8x32xf32>
    %c0_7 = arith.constant 0 : index
    %c0_8 = arith.constant 0 : index
    %8 = vector.load %arg5[%c0_7, %c0_8] : memref<1x32xf32, #tpu.memory_space<vmem>>, vector<1x32xf32>
    %9 = vector.broadcast %8 : vector<1x32xf32> to vector<8x32xf32>
    %10 = arith.addf %7, %9 : vector<8x32xf32>
    %c0_9 = arith.constant 0 : index
    %c0_10 = arith.constant 0 : index
    %11 = vector.load %arg6[%c0_9, %c0_10] : memref<32x32xbf16, #tpu.memory_space<vmem>>, vector<32x32xbf16>
    %cst_11 = arith.constant dense<0.000000e+00> : vector<8x32xf32>
    %12 = tpu.matmul %5, %11, %cst_11 {dimension_numbers = #tpu.dot_dimension_numbers<[1], [0], [0], [1], [0, 0, 1, 1], [], []>} : vector<8x32xbf16>, vector<32x32xbf16>, vector<8x32xf32> -> vector<8x32xf32>
    %c0_12 = arith.constant 0 : index
    %c0_13 = arith.constant 0 : index
    %13 = vector.load %arg7[%c0_12, %c0_13] : memref<1x32xf32, #tpu.memory_space<vmem>>, vector<1x32xf32>
    %14 = vector.broadcast %13 : vector<1x32xf32> to vector<8x32xf32>
    %15 = arith.addf %12, %14 : vector<8x32xf32>
    %c0_14 = arith.constant 0 : index
    %c0_15 = arith.constant 0 : index
    %16 = vector.load %arg8[%c0_14, %c0_15] : memref<32x32xbf16, #tpu.memory_space<vmem>>, vector<32x32xbf16>
    %cst_16 = arith.constant dense<0.000000e+00> : vector<8x32xf32>
    %17 = tpu.matmul %5, %16, %cst_16 {dimension_numbers = #tpu.dot_dimension_numbers<[1], [0], [0], [1], [0, 0, 1, 1], [], []>} : vector<8x32xbf16>, vector<32x32xbf16>, vector<8x32xf32> -> vector<8x32xf32>
    %c0_17 = arith.constant 0 : index
    %c0_18 = arith.constant 0 : index
    %18 = vector.load %arg9[%c0_17, %c0_18] : memref<1x32xf32, #tpu.memory_space<vmem>>, vector<1x32xf32>
    %19 = vector.broadcast %18 : vector<1x32xf32> to vector<8x32xf32>
    %20 = arith.addf %17, %19 : vector<8x32xf32>
    %21 = arith.truncf %10 : vector<8x32xf32> to vector<8x32xbf16>
    %22 = arith.truncf %15 : vector<8x32xf32> to vector<8x32xbf16>
    %23 = arith.truncf %20 : vector<8x32xf32> to vector<8x32xbf16>
    %24 = vector.extract_strided_slice %21 {offsets = [0, 0], sizes = [8, 8], strides = [1, 1]} : vector<8x32xbf16> to vector<8x8xbf16>
    %25 = vector.extract_strided_slice %21 {offsets = [0, 8], sizes = [8, 8], strides = [1, 1]} : vector<8x32xbf16> to vector<8x8xbf16>
    %26 = vector.extract_strided_slice %21 {offsets = [0, 16], sizes = [8, 8], strides = [1, 1]} : vector<8x32xbf16> to vector<8x8xbf16>
    %27 = vector.extract_strided_slice %21 {offsets = [0, 24], sizes = [8, 8], strides = [1, 1]} : vector<8x32xbf16> to vector<8x8xbf16>
    %28 = vector.shape_cast %24 : vector<8x8xbf16> to vector<1x8x8xbf16>
    %29 = vector.shape_cast %25 : vector<8x8xbf16> to vector<1x8x8xbf16>
    %30 = vector.shape_cast %26 : vector<8x8xbf16> to vector<1x8x8xbf16>
    %31 = vector.shape_cast %27 : vector<8x8xbf16> to vector<1x8x8xbf16>
    %32 = tpu.concatenate %28, %29, %30, %31 in 0 : vector<1x8x8xbf16>, vector<1x8x8xbf16>, vector<1x8x8xbf16>, vector<1x8x8xbf16> -> vector<4x8x8xbf16>
    %33 = vector.extract_strided_slice %22 {offsets = [0, 0], sizes = [8, 8], strides = [1, 1]} : vector<8x32xbf16> to vector<8x8xbf16>
    %34 = vector.extract_strided_slice %22 {offsets = [0, 8], sizes = [8, 8], strides = [1, 1]} : vector<8x32xbf16> to vector<8x8xbf16>
    %35 = vector.extract_strided_slice %22 {offsets = [0, 16], sizes = [8, 8], strides = [1, 1]} : vector<8x32xbf16> to vector<8x8xbf16>
    %36 = vector.extract_strided_slice %22 {offsets = [0, 24], sizes = [8, 8], strides = [1, 1]} : vector<8x32xbf16> to vector<8x8xbf16>
    %37 = vector.shape_cast %33 : vector<8x8xbf16> to vector<1x8x8xbf16>
    %38 = vector.shape_cast %34 : vector<8x8xbf16> to vector<1x8x8xbf16>
    %39 = vector.shape_cast %35 : vector<8x8xbf16> to vector<1x8x8xbf16>
    %40 = vector.shape_cast %36 : vector<8x8xbf16> to vector<1x8x8xbf16>
    %41 = tpu.concatenate %37, %38, %39, %40 in 0 : vector<1x8x8xbf16>, vector<1x8x8xbf16>, vector<1x8x8xbf16>, vector<1x8x8xbf16> -> vector<4x8x8xbf16>
    %42 = vector.extract_strided_slice %23 {offsets = [0, 0], sizes = [8, 8], strides = [1, 1]} : vector<8x32xbf16> to vector<8x8xbf16>
    %43 = vector.extract_strided_slice %23 {offsets = [0, 8], sizes = [8, 8], strides = [1, 1]} : vector<8x32xbf16> to vector<8x8xbf16>
    %44 = vector.extract_strided_slice %23 {offsets = [0, 16], sizes = [8, 8], strides = [1, 1]} : vector<8x32xbf16> to vector<8x8xbf16>
    %45 = vector.extract_strided_slice %23 {offsets = [0, 24], sizes = [8, 8], strides = [1, 1]} : vector<8x32xbf16> to vector<8x8xbf16>
    %46 = vector.shape_cast %42 : vector<8x8xbf16> to vector<1x8x8xbf16>
    %47 = vector.shape_cast %43 : vector<8x8xbf16> to vector<1x8x8xbf16>
    %48 = vector.shape_cast %44 : vector<8x8xbf16> to vector<1x8x8xbf16>
    %49 = vector.shape_cast %45 : vector<8x8xbf16> to vector<1x8x8xbf16>
    %50 = tpu.concatenate %46, %47, %48, %49 in 0 : vector<1x8x8xbf16>, vector<1x8x8xbf16>, vector<1x8x8xbf16>, vector<1x8x8xbf16> -> vector<4x8x8xbf16>
    "tpu.trace_start"() <{level = 10 : i32, message = "hqd,hkd->hqk"}> : () -> ()
    %cst_19 = arith.constant dense<0.000000e+00> : vector<4x8x8xf32>
    %51 = tpu.matmul %32, %41, %cst_19 {dimension_numbers = #tpu.dot_dimension_numbers<[2], [2], [1], [1], [0, 0, 0, 1, 1, 1], [0], [0]>} : vector<4x8x8xbf16>, vector<4x8x8xbf16>, vector<4x8x8xf32> -> vector<4x8x8xf32>
    "tpu.trace_stop"() : () -> ()
    %cst_20 = arith.constant dense<0xFF800000> : vector<4x8xf32>
    %52 = vector.multi_reduction <maximumf>, %51, %cst_20 [2] : vector<4x8x8xf32> to vector<4x8xf32>
    %53 = vector.shape_cast %52 : vector<4x8xf32> to vector<4x8x1xf32>
    %54 = vector.broadcast %53 : vector<4x8x1xf32> to vector<4x8x8xf32>
    %55 = arith.subf %51, %54 : vector<4x8x8xf32>
    %56 = math.exp %55 : vector<4x8x8xf32>
    %cst_21 = arith.constant dense<0.000000e+00> : vector<4x8xf32>
    %57 = vector.multi_reduction <add>, %56, %cst_21 [2] : vector<4x8x8xf32> to vector<4x8xf32>
    %58 = vector.shape_cast %57 : vector<4x8xf32> to vector<4x8x1xf32>
    %59 = arith.truncf %56 : vector<4x8x8xf32> to vector<4x8x8xbf16>
    "tpu.trace_start"() <{level = 10 : i32, message = "hqk,hkd->hqd"}> : () -> ()
    %cst_22 = arith.constant dense<0.000000e+00> : vector<4x8x8xf32>
    %60 = tpu.matmul %59, %50, %cst_22 {dimension_numbers = #tpu.dot_dimension_numbers<[2], [1], [1], [2], [0, 0, 0, 1, 1, 2], [0], [0]>} : vector<4x8x8xbf16>, vector<4x8x8xbf16>, vector<4x8x8xf32> -> vector<4x8x8xf32>
    "tpu.trace_stop"() : () -> ()
    %61 = tpu.reciprocal %58 {approx = true} : vector<4x8x1xf32> -> vector<4x8x1xf32>
    %62 = vector.broadcast %61 : vector<4x8x1xf32> to vector<4x8x8xf32>
    %63 = arith.mulf %60, %62 : vector<4x8x8xf32>
    %64 = arith.truncf %63 : vector<4x8x8xf32> to vector<4x8x8xbf16>
    %c0_23 = arith.constant 0 : index
    %c0_24 = arith.constant 0 : index
    %c0_25 = arith.constant 0 : index
    %65 = vector.load %arg10[%c0_23, %c0_24, %c0_25] : memref<4x8x32xbf16, #tpu.memory_space<vmem>>, vector<4x8x32xbf16>
    "tpu.trace_start"() <{level = 10 : i32, message = "hqd,hdo->hqo"}> : () -> ()
    %cst_26 = arith.constant dense<0.000000e+00> : vector<4x8x32xf32>
    %66 = tpu.matmul %64, %65, %cst_26 {dimension_numbers = #tpu.dot_dimension_numbers<[2], [1], [1], [2], [0, 0, 0, 1, 1, 2], [0], [0]>} : vector<4x8x8xbf16>, vector<4x8x32xbf16>, vector<4x8x32xf32> -> vector<4x8x32xf32>
    "tpu.trace_stop"() : () -> ()
    %cst_27 = arith.constant dense<0.000000e+00> : vector<8x32xf32>
    %67 = vector.multi_reduction <add>, %66, %cst_27 [0] : vector<4x8x32xf32> to vector<8x32xf32>
    %c0_28 = arith.constant 0 : index
    %c0_29 = arith.constant 0 : index
    %68 = vector.load %arg11[%c0_28, %c0_29] : memref<1x32xf32, #tpu.memory_space<vmem>>, vector<1x32xf32>
    %69 = vector.broadcast %68 : vector<1x32xf32> to vector<8x32xf32>
    %70 = arith.addf %67, %69 : vector<8x32xf32>
    %71 = arith.addf %1, %70 : vector<8x32xf32>
    %cst_30 = arith.constant dense<0.000000e+00> : vector<8xf32>
    %72 = vector.multi_reduction <add>, %71, %cst_30 [1] : vector<8x32xf32> to vector<8xf32>
    %73 = vector.shape_cast %72 : vector<8xf32> to vector<8x1xf32>
    %cst_31 = arith.constant 3.200000e+01 : f32
    %74 = vector.broadcast %cst_31 : f32 to vector<8x1xf32>
    %75 = arith.divf %73, %74 : vector<8x1xf32>
    %76 = vector.broadcast %75 : vector<8x1xf32> to vector<8x32xf32>
    %77 = arith.subf %71, %76 : vector<8x32xf32>
    %78 = arith.mulf %77, %77 : vector<8x32xf32>
    %cst_32 = arith.constant dense<0.000000e+00> : vector<8xf32>
    %79 = vector.multi_reduction <add>, %78, %cst_32 [1] : vector<8x32xf32> to vector<8xf32>
    %80 = vector.shape_cast %79 : vector<8xf32> to vector<8x1xf32>
    %cst_33 = arith.constant 3.200000e+01 : f32
    %81 = vector.broadcast %cst_33 : f32 to vector<8x1xf32>
    %82 = arith.divf %80, %81 : vector<8x1xf32>
    %83 = vector.broadcast %75 : vector<8x1xf32> to vector<8x32xf32>
    %84 = arith.subf %71, %83 : vector<8x32xf32>
    %cst_34 = arith.constant 9.99999974E-6 : f32
    %85 = vector.broadcast %cst_34 : f32 to vector<8x1xf32>
    %86 = arith.addf %82, %85 : vector<8x1xf32>
    %87 = math.rsqrt %86 : vector<8x1xf32>
    %88 = vector.broadcast %87 : vector<8x1xf32> to vector<8x32xf32>
    %89 = arith.mulf %84, %88 : vector<8x32xf32>
    %c0_35 = arith.constant 0 : index
    %c0_36 = arith.constant 0 : index
    %90 = vector.load %arg16[%c0_35, %c0_36] : memref<1x32xf32, #tpu.memory_space<vmem>>, vector<1x32xf32>
    %91 = vector.broadcast %90 : vector<1x32xf32> to vector<8x32xf32>
    %92 = arith.mulf %89, %91 : vector<8x32xf32>
    %c0_37 = arith.constant 0 : index
    %c0_38 = arith.constant 0 : index
    %93 = vector.load %arg17[%c0_37, %c0_38] : memref<1x32xf32, #tpu.memory_space<vmem>>, vector<1x32xf32>
    %94 = vector.broadcast %93 : vector<1x32xf32> to vector<8x32xf32>
    %95 = arith.addf %92, %94 : vector<8x32xf32>
    %96 = arith.truncf %95 : vector<8x32xf32> to vector<8x32xbf16>
    %c0_39 = arith.constant 0 : index
    %c0_40 = arith.constant 0 : index
    %97 = vector.load %arg12[%c0_39, %c0_40] : memref<32x64xbf16, #tpu.memory_space<vmem>>, vector<32x64xbf16>
    %cst_41 = arith.constant dense<0.000000e+00> : vector<8x64xf32>
    %98 = tpu.matmul %96, %97, %cst_41 {dimension_numbers = #tpu.dot_dimension_numbers<[1], [0], [0], [1], [0, 0, 1, 1], [], []>} : vector<8x32xbf16>, vector<32x64xbf16>, vector<8x64xf32> -> vector<8x64xf32>
    %c0_42 = arith.constant 0 : index
    %c0_43 = arith.constant 0 : index
    %99 = vector.load %arg13[%c0_42, %c0_43] : memref<1x64xf32, #tpu.memory_space<vmem>>, vector<1x64xf32>
    %100 = vector.broadcast %99 : vector<1x64xf32> to vector<8x64xf32>
    %101 = arith.addf %98, %100 : vector<8x64xf32>
    %cst_44 = arith.constant 0.000000e+00 : f32
    %102 = vector.broadcast %cst_44 : f32 to vector<8x64xf32>
    %103 = arith.maximumf %101, %102 : vector<8x64xf32>
    %104 = arith.truncf %103 : vector<8x64xf32> to vector<8x64xbf16>
    %c0_45 = arith.constant 0 : index
    %c0_46 = arith.constant 0 : index
    %105 = vector.load %arg14[%c0_45, %c0_46] : memref<64x32xbf16, #tpu.memory_space<vmem>>, vector<64x32xbf16>
    %cst_47 = arith.constant dense<0.000000e+00> : vector<8x32xf32>
    %106 = tpu.matmul %104, %105, %cst_47 {dimension_numbers = #tpu.dot_dimension_numbers<[1], [0], [0], [1], [0, 0, 1, 1], [], []>} : vector<8x64xbf16>, vector<64x32xbf16>, vector<8x32xf32> -> vector<8x32xf32>
    %c0_48 = arith.constant 0 : index
    %c0_49 = arith.constant 0 : index
    %107 = vector.load %arg15[%c0_48, %c0_49] : memref<1x32xf32, #tpu.memory_space<vmem>>, vector<1x32xf32>
    %108 = vector.broadcast %107 : vector<1x32xf32> to vector<8x32xf32>
    %109 = arith.addf %106, %108 : vector<8x32xf32>
    %110 = arith.addf %95, %109 : vector<8x32xf32>
    %cst_50 = arith.constant dense<0.000000e+00> : vector<8xf32>
    %111 = vector.multi_reduction <add>, %110, %cst_50 [1] : vector<8x32xf32> to vector<8xf32>
    %112 = vector.shape_cast %111 : vector<8xf32> to vector<8x1xf32>
    %cst_51 = arith.constant 3.200000e+01 : f32
    %113 = vector.broadcast %cst_51 : f32 to vector<8x1xf32>
    %114 = arith.divf %112, %113 : vector<8x1xf32>
    %115 = vector.broadcast %114 : vector<8x1xf32> to vector<8x32xf32>
    %116 = arith.subf %110, %115 : vector<8x32xf32>
    %117 = arith.mulf %116, %116 : vector<8x32xf32>
    %cst_52 = arith.constant dense<0.000000e+00> : vector<8xf32>
    %118 = vector.multi_reduction <add>, %117, %cst_52 [1] : vector<8x32xf32> to vector<8xf32>
    %119 = vector.shape_cast %118 : vector<8xf32> to vector<8x1xf32>
    %cst_53 = arith.constant 3.200000e+01 : f32
    %120 = vector.broadcast %cst_53 : f32 to vector<8x1xf32>
    %121 = arith.divf %119, %120 : vector<8x1xf32>
    %122 = vector.broadcast %114 : vector<8x1xf32> to vector<8x32xf32>
    %123 = arith.subf %110, %122 : vector<8x32xf32>
    %cst_54 = arith.constant 9.99999974E-6 : f32
    %124 = vector.broadcast %cst_54 : f32 to vector<8x1xf32>
    %125 = arith.addf %121, %124 : vector<8x1xf32>
    %126 = math.rsqrt %125 : vector<8x1xf32>
    %127 = vector.broadcast %126 : vector<8x1xf32> to vector<8x32xf32>
    %128 = arith.mulf %123, %127 : vector<8x32xf32>
    %c0_55 = arith.constant 0 : index
    %c0_56 = arith.constant 0 : index
    %129 = vector.load %arg18[%c0_55, %c0_56] : memref<1x32xf32, #tpu.memory_space<vmem>>, vector<1x32xf32>
    %130 = vector.broadcast %129 : vector<1x32xf32> to vector<8x32xf32>
    %131 = arith.mulf %128, %130 : vector<8x32xf32>
    %c0_57 = arith.constant 0 : index
    %c0_58 = arith.constant 0 : index
    %132 = vector.load %arg19[%c0_57, %c0_58] : memref<1x32xf32, #tpu.memory_space<vmem>>, vector<1x32xf32>
    %133 = vector.broadcast %132 : vector<1x32xf32> to vector<8x32xf32>
    %134 = arith.addf %131, %133 : vector<8x32xf32>
    %c0_59 = arith.constant 0 : index
    %c0_60 = arith.constant 0 : index
    %c0_61 = arith.constant 0 : index
    %135 = vector.load %arg20[%c0_59, %c0_60, %c0_61] : memref<1x8x32xf32, #tpu.memory_space<vmem>>, vector<1x8x32xf32>
    %136 = vector.shape_cast %135 : vector<1x8x32xf32> to vector<8x32xf32>
    %137 = vector.shape_cast %134 : vector<8x32xf32> to vector<1x8x32xf32>
    tpu.vector_store %arg20[%c0_59, %c0_60, %c0_61], %137 {strides = array<i32>} : memref<1x8x32xf32, #tpu.memory_space<vmem>>, vector<1x8x32xf32>,
    return
  }
  func.func @transform_0(%arg0: i32, %arg1: i32) -> (i32, i32, i32) {
    %c0_i32 = arith.constant 0 : i32
    %c0_i32_0 = arith.constant 0 : i32
    return %arg0, %arg1, %c0_i32 : i32, i32, i32
  }
  func.func @transform_1(%arg0: i32, %arg1: i32) -> (i32, i32, i32) {
    %c0_i32 = arith.constant 0 : i32
    %c0_i32_0 = arith.constant 0 : i32
    %c0_i32_1 = arith.constant 0 : i32
    return %arg0, %c0_i32, %c0_i32_0 : i32, i32, i32
  }
  func.func @transform_2(%arg0: i32, %arg1: i32) -> (i32, i32) {
    %c0_i32 = arith.constant 0 : i32
    %c0_i32_0 = arith.constant 0 : i32
    %c0_i32_1 = arith.constant 0 : i32
    return %c0_i32, %c0_i32_0 : i32, i32
  }
  func.func @transform_3(%arg0: i32, %arg1: i32) -> (i32, i32) {
    %c0_i32 = arith.constant 0 : i32
    %c0_i32_0 = arith.constant 0 : i32
    %c0_i32_1 = arith.constant 0 : i32
    return %c0_i32, %c0_i32_0 : i32, i32
  }
  func.func @transform_4(%arg0: i32, %arg1: i32) -> (i32, i32) {
    %c0_i32 = arith.constant 0 : i32
    %c0_i32_0 = arith.constant 0 : i32
    %c0_i32_1 = arith.constant 0 : i32
    return %c0_i32, %c0_i32_0 : i32, i32
  }
  func.func @transform_5(%arg0: i32, %arg1: i32) -> (i32, i32) {
    %c0_i32 = arith.constant 0 : i32
    %c0_i32_0 = arith.constant 0 : i32
    %c0_i32_1 = arith.constant 0 : i32
    return %c0_i32, %c0_i32_0 : i32, i32
  }
  func.func @transform_6(%arg0: i32, %arg1: i32) -> (i32, i32) {
    %c0_i32 = arith.constant 0 : i32
    %c0_i32_0 = arith.constant 0 : i32
    %c0_i32_1 = arith.constant 0 : i32
    return %c0_i32, %c0_i32_0 : i32, i32
  }
  func.func @transform_7(%arg0: i32, %arg1: i32) -> (i32, i32) {
    %c0_i32 = arith.constant 0 : i32
    %c0_i32_0 = arith.constant 0 : i32
    %c0_i32_1 = arith.constant 0 : i32
    return %c0_i32, %c0_i32_0 : i32, i32
  }
  func.func @transform_8(%arg0: i32, %arg1: i32) -> (i32, i32, i32) {
    %c0_i32 = arith.constant 0 : i32
    %c0_i32_0 = arith.constant 0 : i32
    %c0_i32_1 = arith.constant 0 : i32
    %c0_i32_2 = arith.constant 0 : i32
    return %c0_i32, %c0_i32_0, %c0_i32_1 : i32, i32, i32
  }
  func.func @transform_9(%arg0: i32, %arg1: i32) -> (i32, i32) {
    %c0_i32 = arith.constant 0 : i32
    %c0_i32_0 = arith.constant 0 : i32
    %c0_i32_1 = arith.constant 0 : i32
    return %c0_i32, %c0_i32_0 : i32, i32
  }
  func.func @transform_10(%arg0: i32, %arg1: i32) -> (i32, i32) {
    %c0_i32 = arith.constant 0 : i32
    %c0_i32_0 = arith.constant 0 : i32
    %c0_i32_1 = arith.constant 0 : i32
    return %c0_i32, %c0_i32_0 : i32, i32
  }
  func.func @transform_11(%arg0: i32, %arg1: i32) -> (i32, i32) {
    %c0_i32 = arith.constant 0 : i32
    %c0_i32_0 = arith.constant 0 : i32
    %c0_i32_1 = arith.constant 0 : i32
    return %c0_i32, %c0_i32_0 : i32, i32
  }
  func.func @transform_12(%arg0: i32, %arg1: i32) -> (i32, i32) {
    %c0_i32 = arith.constant 0 : i32
    %c0_i32_0 = arith.constant 0 : i32
    %c0_i32_1 = arith.constant 0 : i32
    return %c0_i32, %c0_i32_0 : i32, i32
  }
  func.func @transform_13(%arg0: i32, %arg1: i32) -> (i32, i32) {
    %c0_i32 = arith.constant 0 : i32
    %c0_i32_0 = arith.constant 0 : i32
    %c0_i32_1 = arith.constant 0 : i32
    return %c0_i32, %c0_i32_0 : i32, i32
  }
  func.func @transform_14(%arg0: i32, %arg1: i32) -> (i32, i32) {
    %c0_i32 = arith.constant 0 : i32
    %c0_i32_0 = arith.constant 0 : i32
    %c0_i32_1 = arith.constant 0 : i32
    return %c0_i32, %c0_i32_0 : i32, i32
  }
  func.func @transform_15(%arg0: i32, %arg1: i32) -> (i32, i32) {
    %c0_i32 = arith.constant 0 : i32
    %c0_i32_0 = arith.constant 0 : i32
    %c0_i32_1 = arith.constant 0 : i32
    return %c0_i32, %c0_i32_0 : i32, i32
  }
  func.func @transform_16(%arg0: i32, %arg1: i32) -> (i32, i32) {
    %c0_i32 = arith.constant 0 : i32
    %c0_i32_0 = arith.constant 0 : i32
    %c0_i32_1 = arith.constant 0 : i32
    return %c0_i32, %c0_i32_0 : i32, i32
  }
  func.func @transform_17(%arg0: i32, %arg1: i32) -> (i32, i32) {
    %c0_i32 = arith.constant 0 : i32
    %c0_i32_0 = arith.constant 0 : i32
    %c0_i32_1 = arith.constant 0 : i32
    return %c0_i32, %c0_i32_0 : i32, i32
  }
  func.func @transform_18(%arg0: i32, %arg1: i32) -> (i32, i32, i32) {
    %c0_i32 = arith.constant 0 : i32
    %c0_i32_0 = arith.constant 0 : i32
    return %arg0, %arg1, %c0_i32 : i32, i32, i32
  }
}

</mosaic_0001>

<llo_original>
// kernel: tpu_custom_call.1
$region0: #{tpu_custom_call.1}
  #allocation0 [shape = 'u32[]', space=smem, size = 0x4, offset = 0x4, fixed_abs, tag = 'smem constant byte address 0x4 - core index']
  #allocation1 [shape = 'u32[144,128]{1,0:T(1,128)}', space=vmem, size = 0x12000, scoped, tag = 'internal scratch']
  %s0 = inlined_call_operand.vmem [shape: f32[2,8,32], index: 0, kind: input, shape index: {}]
  %s1 = inlined_call_operand.vmem [shape: f32[2,8,32], index: 1, kind: input, shape index: {}]
  %s2 = inlined_call_operand.vmem [shape: bf16[32,32], index: 2, kind: input, shape index: {}]
  %s3 = inlined_call_operand.vmem [shape: f32[1,32], index: 3, kind: input, shape index: {}]
  %s4 = inlined_call_operand.hbm [shape: bf16[32,32], index: 4, kind: input, shape index: {}]
  %s5 = inlined_call_operand.vmem [shape: f32[1,32], index: 5, kind: input, shape index: {}]
  %s6 = inlined_call_operand.hbm [shape: bf16[32,32], index: 6, kind: input, shape index: {}]
  %s7 = inlined_call_operand.hbm [shape: f32[1,32], index: 7, kind: input, shape index: {}]
  %s8 = inlined_call_operand.hbm [shape: bf16[4,8,32], index: 8, kind: input, shape index: {}]
  %s9 = inlined_call_operand.hbm [shape: f32[1,32], index: 9, kind: input, shape index: {}]
  %s10 = inlined_call_operand.vmem [shape: bf16[32,64], index: 10, kind: input, shape index: {}]
  %s11 = inlined_call_operand.vmem [shape: f32[1,64], index: 11, kind: input, shape index: {}]
  %s12 = inlined_call_operand.vmem [shape: bf16[64,32], index: 12, kind: input, shape index: {}]
  %s13 = inlined_call_operand.vmem [shape: f32[1,32], index: 13, kind: input, shape index: {}]
  %s14 = inlined_call_operand.vmem [shape: f32[1,32], index: 14, kind: input, shape index: {}]
  %s15 = inlined_call_operand.vmem [shape: f32[1,32], index: 15, kind: input, shape index: {}]
  %s16 = inlined_call_operand.vmem [shape: f32[1,32], index: 16, kind: input, shape index: {}]
  %s17 = inlined_call_operand.vmem [shape: f32[1,32], index: 17, kind: input, shape index: {}]
  %s18 = inlined_call_operand.hbm [shape: f32[2,8,32], index: 18, kind: output, shape index: {}]
  %s19 = sld [smem:[#allocation0]]
  $region125: #{tpu_custom_call.1} parent=0
    _
  %s21 = ssub.s32 1, %s19
  %s22 = scalar_select 0, %s21, %s19
  $region1: #{tpu_custom_call.1} parent=0
    #allocation2 [shape = 'u8[8192]{0}', space=vmem, size = 0x2000, scoped, tag = 'input window, operand 4, single buffered']
    #allocation3 [shape = 's32[2]{0}', space=sflag, size = 0x8, scoped, tag = 'scoped memory for tpu_custom_call.1']
    #allocation4 [shape = 's32[2]{0}', space=sflag, size = 0x8, scoped, tag = 'scoped memory for tpu_custom_call.1']
    #allocation5 [shape = 'u8[8192]{0}', space=vmem, size = 0x2000, scoped, tag = 'input window, operand 6, single buffered']
    #allocation6 [shape = 's32[1]{0}', space=sflag, size = 0x4, scoped, tag = 'scoped memory for tpu_custom_call.1']
    #allocation7 [shape = 'u8[512]{0}', space=vmem, size = 0x400, scoped, tag = 'input window, operand 7, single buffered']
    #allocation8 [shape = 'u8[8192]{0}', space=vmem, size = 0x2000, scoped, tag = 'input window, operand 8, single buffered']
    #allocation9 [shape = 's32[1]{0}', space=sflag, size = 0x4, scoped, tag = 'scoped memory for tpu_custom_call.1']
    #allocation10 [shape = 'u8[512]{0}', space=vmem, size = 0x400, scoped, tag = 'input window, operand 9, single buffered']
    #allocation11 [shape = 'u8[8192]{0}', space=vmem, size = 0x2000, scoped, tag = 'output window, operand 0']
    %23 = vsyncpa [#allocation3], 0
    %24 = vsyncpa [#allocation6], 0
    %25 = vsyncpa [#allocation9], 0
    %26 = vsyncpa [#allocation4], 0
    %s27 = scalar_lea.sflag [#allocation4], 1
    %28 = vsyncpa %s27, 0
    loop: start=0, step=1, limit=4
    $region2: #{tpu_custom_call.1} parent=1 // loop_pre_header
      _
    $region3: #{tpu_custom_call.1} parent=1 // loop_header
      %s30 = sphi 0, %s34
      %p31 = scmp.ge.s32.totalorder %s30, 4
      %s37 = sphi 0, %s49
      %s38 = sphi 0, %s45
      %s39 = sphi 0, %s37
      %s40 = sphi 0, %s38
      %s41 = sphi 0, %s39
      %s42 = sphi 0, %s40
      %s54 = sphi 0, %s56
      %s57 = sphi 0, %s54
      %s58 = sphi 0, %s57
      %s74 = sphi 0, %s58
      %s80 = sphi 0, %s82
      %s83 = sphi 0, %s80
      %s84 = sphi 0, %s83
      %s100 = sphi 0, %s84
      %s104 = sphi 0, %s104
      %s106 = sphi 0, %s104
      %s107 = sphi 0, %s106
      %s121 = sphi 0, %s107
      %s125 = sphi 0, %s125
      %s127 = sphi 0, %s125
      %s128 = sphi 0, %s127
      %s142 = sphi 0, %s128
      %s146 = sphi 0, %s146
      %s148 = sphi 0, %s146
      %s149 = sphi 0, %s148
      %s163 = sphi 0, %s149
      %s167 = sphi 0, %s167
      %s169 = sphi 0, %s167
      %s170 = sphi 0, %s169
      %s184 = sphi 0, %s170
      %s188 = sphi 0, %s188
      %s190 = sphi 0, %s188
      %s191 = sphi 0, %s190
      %s205 = sphi 0, %s191
      %s209 = sphi 0, %s209
      %s211 = sphi 0, %s209
      %s212 = sphi 0, %s211
      %s226 = sphi 0, %s212
      %s230 = sphi 0, %s230
      %s232 = sphi 0, %s230
      %s233 = sphi 0, %s232
      %s247 = sphi 0, %s233
      %s251 = sphi 0, %s251
      %s253 = sphi 0, %s251
      %s254 = sphi 0, %s253
      %s268 = sphi 0, %s254
      %s272 = sphi 0, %s272
      %s274 = sphi 0, %s272
      %s275 = sphi 0, %s274
      %s289 = sphi 0, %s275
      %s293 = sphi 0, %s293
      %s295 = sphi 0, %s293
      %s296 = sphi 0, %s295
      %s310 = sphi 0, %s296
      %s314 = sphi 0, %s314
      %s316 = sphi 0, %s314
      %s317 = sphi 0, %s316
      %s331 = sphi 0, %s317
      %s335 = sphi 0, %s335
      %s337 = sphi 0, %s335
      %s338 = sphi 0, %s337
      %s352 = sphi 0, %s338
      %s356 = sphi 0, %s356
      %s358 = sphi 0, %s356
      %s359 = sphi 0, %s358
      %s373 = sphi 0, %s359
      %s377 = sphi 0, %s377
      %s379 = sphi 0, %s377
      %s380 = sphi 0, %s379
      %s394 = sphi 0, %s380
      %s398 = sphi 0, %s398
      %s400 = sphi 0, %s398
      %s401 = sphi 0, %s400
      %s415 = sphi 0, %s401
      %s419 = sphi 0, %s419
      %s421 = sphi 0, %s419
      %s422 = sphi 0, %s421
      %s436 = sphi 0, %s422
      %s444 = sphi 0, %s446
      %s447 = sphi 0, %s444
      %s448 = sphi 0, %s447
      %s464 = sphi 0, %s448
    $region4: #{tpu_custom_call.1} parent=1 // loop_header_branch
      %33 = sbr.rel (%p31) target = $region8
    $region5: #{tpu_custom_call.1} parent=1 // loop_body
      %s35 = ssub.s32 %s30, 1
      %s36 = ssub.s32 %s30, 2
      %s43 = sadd.s32 1, %s38
      %p44 = scmp.ge.s32.totalorder %s43, 1
      %s45 = scalar_select %p44, 0, %s43
      %s46 = sadd.s32 1, %s37
      %s47 = scalar_select %p44, %s46, %s37
      %p48 = scmp.ge.s32.totalorder %s47, 2
      %s49 = scalar_select %p48, 0, %s47
      %s50 = ssub.s32 %s37, %s49
      %s51 = ssub.s32 %s38, %s45
      %s52 = sor.u32 %s50, %s51
      %p53 = scmp.eq.s32.totalorder %s52, 0
      %s55 = sadd.s32 %s54, 1
      %s56 = scalar_select %p53, %s54, %s55
      %p59 = pneg %p53
      %p60 = scmp.eq.s32.totalorder %s30, 1
      %p61 = por %p59, %p60
      %p62 = scmp.ne.s32.totalorder %s54, %s57
      %p63 = scmp.eq.s32.totalorder %s30, 0
      %p64 = por %p62, %p63
      %p65 = scmp.ne.s32.totalorder %s54, %s57
      %p66 = scmp.eq.s32.totalorder %s35, 1
      %p67 = por %p65, %p66
      %p68 = scmp.ne.s32.totalorder %s57, %s58
      %p69 = scmp.eq.s32.totalorder %s35, 0
      %p70 = por %p68, %p69
      %p71 = scmp.ne.s32.totalorder %s57, %s58
      %p72 = scmp.eq.s32.totalorder %s36, 1
      %p73 = por %p71, %p72
      %p75 = scmp.ne.s32.totalorder %s58, %s74
      %p76 = scmp.eq.s32.totalorder %s36, 0
      %p77 = por %p75, %p76
      %s78 = ssub.s32 %s37, %s49
      %p79 = scmp.eq.s32.totalorder %s78, 0
      %s81 = sadd.s32 %s80, 1
      %s82 = scalar_select %p79, %s80, %s81
      %p85 = pneg %p79
      %p86 = scmp.eq.s32.totalorder %s30, 1
      %p87 = por %p85, %p86
      %p88 = scmp.ne.s32.totalorder %s80, %s83
      %p89 = scmp.eq.s32.totalorder %s30, 0
      %p90 = por %p88, %p89
      %p91 = scmp.ne.s32.totalorder %s80, %s83
      %p92 = scmp.eq.s32.totalorder %s35, 1
      %p93 = por %p91, %p92
      %p94 = scmp.ne.s32.totalorder %s83, %s84
      %p95 = scmp.eq.s32.totalorder %s35, 0
      %p96 = por %p94, %p95
      %p97 = scmp.ne.s32.totalorder %s83, %s84
      %p98 = scmp.eq.s32.totalorder %s36, 1
      %p99 = por %p97, %p98
      %p101 = scmp.ne.s32.totalorder %s84, %s100
      %p102 = scmp.eq.s32.totalorder %s36, 0
      %p103 = por %p101, %p102
      %s105 = sadd.s32 %s104, 1
      %p108 = scmp.eq.s32.totalorder %s30, 1
      %p109 = scmp.ne.s32.totalorder %s104, %s106
      %p110 = scmp.eq.s32.totalorder %s30, 0
      %p111 = por %p109, %p110
      %p112 = scmp.ne.s32.totalorder %s104, %s106
      %p113 = scmp.eq.s32.totalorder %s35, 1
      %p114 = por %p112, %p113
      %p115 = scmp.ne.s32.totalorder %s106, %s107
      %p116 = scmp.eq.s32.totalorder %s35, 0
      %p117 = por %p115, %p116
      %p118 = scmp.ne.s32.totalorder %s106, %s107
      %p119 = scmp.eq.s32.totalorder %s36, 1
      %p120 = por %p118, %p119
      %p122 = scmp.ne.s32.totalorder %s107, %s121
      %p123 = scmp.eq.s32.totalorder %s36, 0
      %p124 = por %p122, %p123
      %s126 = sadd.s32 %s125, 1
      %p129 = scmp.eq.s32.totalorder %s30, 1
      %p130 = scmp.ne.s32.totalorder %s125, %s127
      %p131 = scmp.eq.s32.totalorder %s30, 0
      %p132 = por %p130, %p131
      %p133 = scmp.ne.s32.totalorder %s125, %s127
      %p134 = scmp.eq.s32.totalorder %s35, 1
      %p135 = por %p133, %p134
      %p136 = scmp.ne.s32.totalorder %s127, %s128
      %p137 = scmp.eq.s32.totalorder %s35, 0
      %p138 = por %p136, %p137
      %p139 = scmp.ne.s32.totalorder %s127, %s128
      %p140 = scmp.eq.s32.totalorder %s36, 1
      %p141 = por %p139, %p140
      %p143 = scmp.ne.s32.totalorder %s128, %s142
      %p144 = scmp.eq.s32.totalorder %s36, 0
      %p145 = por %p143, %p144
      %s147 = sadd.s32 %s146, 1
      %p150 = scmp.eq.s32.totalorder %s30, 1
      %p151 = scmp.ne.s32.totalorder %s146, %s148
      %p152 = scmp.eq.s32.totalorder %s30, 0
      %p153 = por %p151, %p152
      %p154 = scmp.ne.s32.totalorder %s146, %s148
      %p155 = scmp.eq.s32.totalorder %s35, 1
      %p156 = por %p154, %p155
      %p157 = scmp.ne.s32.totalorder %s148, %s149
      %p158 = scmp.eq.s32.totalorder %s35, 0
      %p159 = por %p157, %p158
      %p160 = scmp.ne.s32.totalorder %s148, %s149
      %p161 = scmp.eq.s32.totalorder %s36, 1
      %p162 = por %p160, %p161
      %p164 = scmp.ne.s32.totalorder %s149, %s163
      %p165 = scmp.eq.s32.totalorder %s36, 0
      %p166 = por %p164, %p165
      %s168 = sadd.s32 %s167, 1
      %p171 = scmp.eq.s32.totalorder %s30, 1
      %p172 = scmp.ne.s32.totalorder %s167, %s169
      %p173 = scmp.eq.s32.totalorder %s30, 0
      %p174 = por %p172, %p173
      %p175 = scmp.ne.s32.totalorder %s167, %s169
      %p176 = scmp.eq.s32.totalorder %s35, 1
      %p177 = por %p175, %p176
      %p178 = scmp.ne.s32.totalorder %s169, %s170
      %p179 = scmp.eq.s32.totalorder %s35, 0
      %p180 = por %p178, %p179
      %p181 = scmp.ne.s32.totalorder %s169, %s170
      %p182 = scmp.eq.s32.totalorder %s36, 1
      %p183 = por %p181, %p182
      %p185 = scmp.ne.s32.totalorder %s170, %s184
      %p186 = scmp.eq.s32.totalorder %s36, 0
      %p187 = por %p185, %p186
      %s189 = sadd.s32 %s188, 1
      %p192 = scmp.eq.s32.totalorder %s30, 1
      %p193 = scmp.ne.s32.totalorder %s188, %s190
      %p194 = scmp.eq.s32.totalorder %s30, 0
      %p195 = por %p193, %p194
      %p196 = scmp.ne.s32.totalorder %s188, %s190
      %p197 = scmp.eq.s32.totalorder %s35, 1
      %p198 = por %p196, %p197
      %p199 = scmp.ne.s32.totalorder %s190, %s191
      %p200 = scmp.eq.s32.totalorder %s35, 0
      %p201 = por %p199, %p200
      %p202 = scmp.ne.s32.totalorder %s190, %s191
      %p203 = scmp.eq.s32.totalorder %s36, 1
      %p204 = por %p202, %p203
      %p206 = scmp.ne.s32.totalorder %s191, %s205
      %p207 = scmp.eq.s32.totalorder %s36, 0
      %p208 = por %p206, %p207
      %s210 = sadd.s32 %s209, 1
      %p213 = scmp.eq.s32.totalorder %s30, 1
      %p214 = scmp.ne.s32.totalorder %s209, %s211
      %p215 = scmp.eq.s32.totalorder %s30, 0
      %p216 = por %p214, %p215
      %p217 = scmp.ne.s32.totalorder %s209, %s211
      %p218 = scmp.eq.s32.totalorder %s35, 1
      %p219 = por %p217, %p218
      %p220 = scmp.ne.s32.totalorder %s211, %s212
      %p221 = scmp.eq.s32.totalorder %s35, 0
      %p222 = por %p220, %p221
      %p223 = scmp.ne.s32.totalorder %s211, %s212
      %p224 = scmp.eq.s32.totalorder %s36, 1
      %p225 = por %p223, %p224
      %p227 = scmp.ne.s32.totalorder %s212, %s226
      %p228 = scmp.eq.s32.totalorder %s36, 0
      %p229 = por %p227, %p228
      %s231 = sadd.s32 %s230, 1
      %p234 = scmp.eq.s32.totalorder %s30, 1
      %p235 = scmp.ne.s32.totalorder %s230, %s232
      %p236 = scmp.eq.s32.totalorder %s30, 0
      %p237 = por %p235, %p236
      %p238 = scmp.ne.s32.totalorder %s230, %s232
      %p239 = scmp.eq.s32.totalorder %s35, 1
      %p240 = por %p238, %p239
      %p241 = scmp.ne.s32.totalorder %s232, %s233
      %p242 = scmp.eq.s32.totalorder %s35, 0
      %p243 = por %p241, %p242
      %p244 = scmp.ne.s32.totalorder %s232, %s233
      %p245 = scmp.eq.s32.totalorder %s36, 1
      %p246 = por %p244, %p245
      %p248 = scmp.ne.s32.totalorder %s233, %s247
      %p249 = scmp.eq.s32.totalorder %s36, 0
      %p250 = por %p248, %p249
      %s252 = sadd.s32 %s251, 1
      %p255 = scmp.eq.s32.totalorder %s30, 1
      %p256 = scmp.ne.s32.totalorder %s251, %s253
      %p257 = scmp.eq.s32.totalorder %s30, 0
      %p258 = por %p256, %p257
      %p259 = scmp.ne.s32.totalorder %s251, %s253
      %p260 = scmp.eq.s32.totalorder %s35, 1
      %p261 = por %p259, %p260
      %p262 = scmp.ne.s32.totalorder %s253, %s254
      %p263 = scmp.eq.s32.totalorder %s35, 0
      %p264 = por %p262, %p263
      %p265 = scmp.ne.s32.totalorder %s253, %s254
      %p266 = scmp.eq.s32.totalorder %s36, 1
      %p267 = por %p265, %p266
      %p269 = scmp.ne.s32.totalorder %s254, %s268
      %p270 = scmp.eq.s32.totalorder %s36, 0
      %p271 = por %p269, %p270
      %s273 = sadd.s32 %s272, 1
      %p276 = scmp.eq.s32.totalorder %s30, 1
      %p277 = scmp.ne.s32.totalorder %s272, %s274
      %p278 = scmp.eq.s32.totalorder %s30, 0
      %p279 = por %p277, %p278
      %p280 = scmp.ne.s32.totalorder %s272, %s274
      %p281 = scmp.eq.s32.totalorder %s35, 1
      %p282 = por %p280, %p281
      %p283 = scmp.ne.s32.totalorder %s274, %s275
      %p284 = scmp.eq.s32.totalorder %s35, 0
      %p285 = por %p283, %p284
      %p286 = scmp.ne.s32.totalorder %s274, %s275
      %p287 = scmp.eq.s32.totalorder %s36, 1
      %p288 = por %p286, %p287
      %p290 = scmp.ne.s32.totalorder %s275, %s289
      %p291 = scmp.eq.s32.totalorder %s36, 0
      %p292 = por %p290, %p291
      %s294 = sadd.s32 %s293, 1
      %p297 = scmp.eq.s32.totalorder %s30, 1
      %p298 = scmp.ne.s32.totalorder %s293, %s295
      %p299 = scmp.eq.s32.totalorder %s30, 0
      %p300 = por %p298, %p299
      %p301 = scmp.ne.s32.totalorder %s293, %s295
      %p302 = scmp.eq.s32.totalorder %s35, 1
      %p303 = por %p301, %p302
      %p304 = scmp.ne.s32.totalorder %s295, %s296
      %p305 = scmp.eq.s32.totalorder %s35, 0
      %p306 = por %p304, %p305
      %p307 = scmp.ne.s32.totalorder %s295, %s296
      %p308 = scmp.eq.s32.totalorder %s36, 1
      %p309 = por %p307, %p308
      %p311 = scmp.ne.s32.totalorder %s296, %s310
      %p312 = scmp.eq.s32.totalorder %s36, 0
      %p313 = por %p311, %p312
      %s315 = sadd.s32 %s314, 1
      %p318 = scmp.eq.s32.totalorder %s30, 1
      %p319 = scmp.ne.s32.totalorder %s314, %s316
      %p320 = scmp.eq.s32.totalorder %s30, 0
      %p321 = por %p319, %p320
      %p322 = scmp.ne.s32.totalorder %s314, %s316
      %p323 = scmp.eq.s32.totalorder %s35, 1
      %p324 = por %p322, %p323
      %p325 = scmp.ne.s32.totalorder %s316, %s317
      %p326 = scmp.eq.s32.totalorder %s35, 0
      %p327 = por %p325, %p326
      %p328 = scmp.ne.s32.totalorder %s316, %s317
      %p329 = scmp.eq.s32.totalorder %s36, 1
      %p330 = por %p328, %p329
      %p332 = scmp.ne.s32.totalorder %s317, %s331
      %p333 = scmp.eq.s32.totalorder %s36, 0
      %p334 = por %p332, %p333
      %s336 = sadd.s32 %s335, 1
      %p339 = scmp.eq.s32.totalorder %s30, 1
      %p340 = scmp.ne.s32.totalorder %s335, %s337
      %p341 = scmp.eq.s32.totalorder %s30, 0
      %p342 = por %p340, %p341
      %p343 = scmp.ne.s32.totalorder %s335, %s337
      %p344 = scmp.eq.s32.totalorder %s35, 1
      %p345 = por %p343, %p344
      %p346 = scmp.ne.s32.totalorder %s337, %s338
      %p347 = scmp.eq.s32.totalorder %s35, 0
      %p348 = por %p346, %p347
      %p349 = scmp.ne.s32.totalorder %s337, %s338
      %p350 = scmp.eq.s32.totalorder %s36, 1
      %p351 = por %p349, %p350
      %p353 = scmp.ne.s32.totalorder %s338, %s352
      %p354 = scmp.eq.s32.totalorder %s36, 0
      %p355 = por %p353, %p354
      %s357 = sadd.s32 %s356, 1
      %p360 = scmp.eq.s32.totalorder %s30, 1
      %p361 = scmp.ne.s32.totalorder %s356, %s358
      %p362 = scmp.eq.s32.totalorder %s30, 0
      %p363 = por %p361, %p362
      %p364 = scmp.ne.s32.totalorder %s356, %s358
      %p365 = scmp.eq.s32.totalorder %s35, 1
      %p366 = por %p364, %p365
      %p367 = scmp.ne.s32.totalorder %s358, %s359
      %p368 = scmp.eq.s32.totalorder %s35, 0
      %p369 = por %p367, %p368
      %p370 = scmp.ne.s32.totalorder %s358, %s359
      %p371 = scmp.eq.s32.totalorder %s36, 1
      %p372 = por %p370, %p371
      %p374 = scmp.ne.s32.totalorder %s359, %s373
      %p375 = scmp.eq.s32.totalorder %s36, 0
      %p376 = por %p374, %p375
      %s378 = sadd.s32 %s377, 1
      %p381 = scmp.eq.s32.totalorder %s30, 1
      %p382 = scmp.ne.s32.totalorder %s377, %s379
      %p383 = scmp.eq.s32.totalorder %s30, 0
      %p384 = por %p382, %p383
      %p385 = scmp.ne.s32.totalorder %s377, %s379
      %p386 = scmp.eq.s32.totalorder %s35, 1
      %p387 = por %p385, %p386
      %p388 = scmp.ne.s32.totalorder %s379, %s380
      %p389 = scmp.eq.s32.totalorder %s35, 0
      %p390 = por %p388, %p389
      %p391 = scmp.ne.s32.totalorder %s379, %s380
      %p392 = scmp.eq.s32.totalorder %s36, 1
      %p393 = por %p391, %p392
      %p395 = scmp.ne.s32.totalorder %s380, %s394
      %p396 = scmp.eq.s32.totalorder %s36, 0
      %p397 = por %p395, %p396
      %s399 = sadd.s32 %s398, 1
      %p402 = scmp.eq.s32.totalorder %s30, 1
      %p403 = scmp.ne.s32.totalorder %s398, %s400
      %p404 = scmp.eq.s32.totalorder %s30, 0
      %p405 = por %p403, %p404
      %p406 = scmp.ne.s32.totalorder %s398, %s400
      %p407 = scmp.eq.s32.totalorder %s35, 1
      %p408 = por %p406, %p407
      %p409 = scmp.ne.s32.totalorder %s400, %s401
      %p410 = scmp.eq.s32.totalorder %s35, 0
      %p411 = por %p409, %p410
      %p412 = scmp.ne.s32.totalorder %s400, %s401
      %p413 = scmp.eq.s32.totalorder %s36, 1
      %p414 = por %p412, %p413
      %p416 = scmp.ne.s32.totalorder %s401, %s415
      %p417 = scmp.eq.s32.totalorder %s36, 0
      %p418 = por %p416, %p417
      %s420 = sadd.s32 %s419, 1
      %p423 = scmp.eq.s32.totalorder %s30, 1
      %p424 = scmp.ne.s32.totalorder %s419, %s421
      %p425 = scmp.eq.s32.totalorder %s30, 0
      %p426 = por %p424, %p425
      %p427 = scmp.ne.s32.totalorder %s419, %s421
      %p428 = scmp.eq.s32.totalorder %s35, 1
      %p429 = por %p427, %p428
      %p430 = scmp.ne.s32.totalorder %s421, %s422
      %p431 = scmp.eq.s32.totalorder %s35, 0
      %p432 = por %p430, %p431
      %p433 = scmp.ne.s32.totalorder %s421, %s422
      %p434 = scmp.eq.s32.totalorder %s36, 1
      %p435 = por %p433, %p434
      %p437 = scmp.ne.s32.totalorder %s422, %s436
      %p438 = scmp.eq.s32.totalorder %s36, 0
      %p439 = por %p437, %p438
      %s440 = ssub.s32 %s37, %s49
      %s441 = ssub.s32 %s38, %s45
      %s442 = sor.u32 %s440, %s441
      %p443 = scmp.eq.s32.totalorder %s442, 0
      %s445 = sadd.s32 %s444, 1
      %s446 = scalar_select %p443, %s444, %s445
      %p449 = pneg %p443
      %p450 = scmp.eq.s32.totalorder %s30, 1
      %p451 = por %p449, %p450
      %p452 = scmp.ne.s32.totalorder %s444, %s447
      %p453 = scmp.eq.s32.totalorder %s30, 0
      %p454 = por %p452, %p453
      %p455 = scmp.ne.s32.totalorder %s444, %s447
      %p456 = scmp.eq.s32.totalorder %s35, 1
      %p457 = por %p455, %p456
      %p458 = scmp.ne.s32.totalorder %s447, %s448
      %p459 = scmp.eq.s32.totalorder %s35, 0
      %p460 = por %p458, %p459
      %p461 = scmp.ne.s32.totalorder %s447, %s448
      %p462 = scmp.eq.s32.totalorder %s36, 1
      %p463 = por %p461, %p462
      %p465 = scmp.ne.s32.totalorder %s448, %s464
      %p466 = scmp.eq.s32.totalorder %s36, 0
      %p467 = por %p465, %p466
      %p468 = scmp.le.s32.totalorder 1, %s30
      %p469 = scmp.lt.s32.totalorder %s30, 3
      %p470 = pnand %p468, %p469
      %p471 = pneg %p470
      // Predicated region
      $region9: #{tpu_custom_call.1} parent=5 // pred_check
        _
      $region10: #{tpu_custom_call.1} parent=5 // pred_check_branch
        %473 = sbr.rel (%p470) target = $region12
      $region11: #{tpu_custom_call.1} parent=5 // pred_region
        %s474 = ssub.s32 %s30, 1
        // Predicated region
        $region13: #{tpu_custom_call.1} parent=11 // pred_check
          %p475 = pneg %p117
        $region14: #{tpu_custom_call.1} parent=11 // pred_check_branch
          %477 = sbr.rel (%p475) target = $region16
        $region15: #{tpu_custom_call.1} parent=11 // pred_region
          _
        $region16: #{tpu_custom_call.1} parent=11 // pred_fallthru
          _
        // Predicated region
        $region17: #{tpu_custom_call.1} parent=11 // pred_check
          %p478 = pneg %p138
        $region18: #{tpu_custom_call.1} parent=11 // pred_check_branch
          %480 = sbr.rel (%p478) target = $region20
        $region19: #{tpu_custom_call.1} parent=11 // pred_region
          _
        $region20: #{tpu_custom_call.1} parent=11 // pred_fallthru
          _
        // Predicated region
        $region21: #{tpu_custom_call.1} parent=11 // pred_check
          %p481 = pneg %p159
        $region22: #{tpu_custom_call.1} parent=11 // pred_check_branch
          %483 = sbr.rel (%p481) target = $region24
        $region23: #{tpu_custom_call.1} parent=11 // pred_region
          %s485 = ssub.s32 256, 256
          %486 = vsyncadd [#allocation3], %s485
          %s487 = sshll.u32 [#allocation2], 4
          %s488 = int_to_ptr.vmem [resolvable:$true] %s487
          %493 = dma.hbm_to_vmem [thread:$0]  %s4, 256, %s488, [#allocation3], 64, 64, 4
        $region24: #{tpu_custom_call.1} parent=11 // pred_fallthru
          _
        // Predicated region
        $region25: #{tpu_custom_call.1} parent=11 // pred_check
          %p494 = pneg %p180
        $region26: #{tpu_custom_call.1} parent=11 // pred_check_branch
          %496 = sbr.rel (%p494) target = $region28
        $region27: #{tpu_custom_call.1} parent=11 // pred_region
          _
        $region28: #{tpu_custom_call.1} parent=11 // pred_fallthru
          _
        // Predicated region
        $region29: #{tpu_custom_call.1} parent=11 // pred_check
          %p497 = pneg %p201
        $region30: #{tpu_custom_call.1} parent=11 // pred_check_branch
          %499 = sbr.rel (%p497) target = $region32
        $region31: #{tpu_custom_call.1} parent=11 // pred_region
          %s501 = ssub.s32 256, 256
          %502 = vsyncadd [#allocation6], %s501
          %s503 = sshll.u32 [#allocation5], 4
          %s504 = int_to_ptr.vmem [resolvable:$true] %s503
          %509 = dma.hbm_to_vmem [thread:$0]  %s6, 256, %s504, [#allocation6], 64, 64, 4
        $region32: #{tpu_custom_call.1} parent=11 // pred_fallthru
          _
        // Predicated region
        $region33: #{tpu_custom_call.1} parent=11 // pred_check
          %p510 = pneg %p222
        $region34: #{tpu_custom_call.1} parent=11 // pred_check_branch
          %512 = sbr.rel (%p510) target = $region36
        $region35: #{tpu_custom_call.1} parent=11 // pred_region
          %s514 = ssub.s32 16, 16
          %515 = vsyncadd [#allocation6], %s514
          %s517 = sshll.u32 [#allocation7], 4
          %s518 = int_to_ptr.vmem [resolvable:$true] %s517
          %520 = dma.hbm_to_vmem [thread:$0]  %s7, 16, %s518, [#allocation6]
        $region36: #{tpu_custom_call.1} parent=11 // pred_fallthru
          _
        // Predicated region
        $region37: #{tpu_custom_call.1} parent=11 // pred_check
          %p521 = pneg %p243
        $region38: #{tpu_custom_call.1} parent=11 // pred_check_branch
          %523 = sbr.rel (%p521) target = $region40
        $region39: #{tpu_custom_call.1} parent=11 // pred_region
          %s525 = ssub.s32 256, 256
          %526 = vsyncadd [#allocation9], %s525
          %s527 = sshll.u32 [#allocation8], 4
          %s528 = int_to_ptr.vmem [resolvable:$true] %s527
          %533 = dma.hbm_to_vmem [thread:$0]  %s8, 256, %s528, [#allocation9], 64, 64, 4
        $region40: #{tpu_custom_call.1} parent=11 // pred_fallthru
          _
        // Predicated region
        $region41: #{tpu_custom_call.1} parent=11 // pred_check
          %p534 = pneg %p264
        $region42: #{tpu_custom_call.1} parent=11 // pred_check_branch
          %536 = sbr.rel (%p534) target = $region44
        $region43: #{tpu_custom_call.1} parent=11 // pred_region
          %s538 = ssub.s32 16, 16
          %539 = vsyncadd [#allocation9], %s538
          %s541 = sshll.u32 [#allocation10], 4
          %s542 = int_to_ptr.vmem [resolvable:$true] %s541
          %544 = dma.hbm_to_vmem [thread:$0]  %s9, 16, %s542, [#allocation9]
        $region44: #{tpu_custom_call.1} parent=11 // pred_fallthru
          _
        // Predicated region
        $region45: #{tpu_custom_call.1} parent=11 // pred_check
          %p545 = pneg %p285
        $region46: #{tpu_custom_call.1} parent=11 // pred_check_branch
          %547 = sbr.rel (%p545) target = $region48
        $region47: #{tpu_custom_call.1} parent=11 // pred_region
          _
        $region48: #{tpu_custom_call.1} parent=11 // pred_fallthru
          _
        // Predicated region
        $region49: #{tpu_custom_call.1} parent=11 // pred_check
          %p548 = pneg %p306
        $region50: #{tpu_custom_call.1} parent=11 // pred_check_branch
          %550 = sbr.rel (%p548) target = $region52
        $region51: #{tpu_custom_call.1} parent=11 // pred_region
          _
        $region52: #{tpu_custom_call.1} parent=11 // pred_fallthru
          _
        // Predicated region
        $region53: #{tpu_custom_call.1} parent=11 // pred_check
          %p551 = pneg %p327
        $region54: #{tpu_custom_call.1} parent=11 // pred_check_branch
          %553 = sbr.rel (%p551) target = $region56
        $region55: #{tpu_custom_call.1} parent=11 // pred_region
          _
        $region56: #{tpu_custom_call.1} parent=11 // pred_fallthru
          _
        // Predicated region
        $region57: #{tpu_custom_call.1} parent=11 // pred_check
          %p554 = pneg %p348
        $region58: #{tpu_custom_call.1} parent=11 // pred_check_branch
          %556 = sbr.rel (%p554) target = $region60
        $region59: #{tpu_custom_call.1} parent=11 // pred_region
          _
        $region60: #{tpu_custom_call.1} parent=11 // pred_fallthru
          _
        // Predicated region
        $region61: #{tpu_custom_call.1} parent=11 // pred_check
          %p557 = pneg %p369
        $region62: #{tpu_custom_call.1} parent=11 // pred_check_branch
          %559 = sbr.rel (%p557) target = $region64
        $region63: #{tpu_custom_call.1} parent=11 // pred_region
          _
        $region64: #{tpu_custom_call.1} parent=11 // pred_fallthru
          _
        // Predicated region
        $region65: #{tpu_custom_call.1} parent=11 // pred_check
          %p560 = pneg %p390
        $region66: #{tpu_custom_call.1} parent=11 // pred_check_branch
          %562 = sbr.rel (%p560) target = $region68
        $region67: #{tpu_custom_call.1} parent=11 // pred_region
          _
        $region68: #{tpu_custom_call.1} parent=11 // pred_fallthru
          _
        // Predicated region
        $region69: #{tpu_custom_call.1} parent=11 // pred_check
          %p563 = pneg %p411
        $region70: #{tpu_custom_call.1} parent=11 // pred_check_branch
          %565 = sbr.rel (%p563) target = $region72
        $region71: #{tpu_custom_call.1} parent=11 // pred_region
          _
        $region72: #{tpu_custom_call.1} parent=11 // pred_fallthru
          _
        // Predicated region
        $region73: #{tpu_custom_call.1} parent=11 // pred_check
          %p566 = pneg %p432
        $region74: #{tpu_custom_call.1} parent=11 // pred_check_branch
          %568 = sbr.rel (%p566) target = $region76
        $region75: #{tpu_custom_call.1} parent=11 // pred_region
          _
        $region76: #{tpu_custom_call.1} parent=11 // pred_fallthru
          _
      $region12: #{tpu_custom_call.1} parent=5 // pred_fallthru
        _
      %p569 = scmp.lt.s32.totalorder %s30, 2
      // Predicated region
      $region77: #{tpu_custom_call.1} parent=5 // pred_check
        %p570 = pneg %p569
      $region78: #{tpu_custom_call.1} parent=5 // pred_check_branch
        %572 = sbr.rel (%p570) target = $region80
      $region79: #{tpu_custom_call.1} parent=5 // pred_region
        // Predicated region
        $region81: #{tpu_custom_call.1} parent=79 // pred_check
          %p573 = pneg %p64
        $region82: #{tpu_custom_call.1} parent=79 // pred_check_branch
          %575 = sbr.rel (%p573) target = $region84
        $region83: #{tpu_custom_call.1} parent=79 // pred_region
          %p576 = scmp.lt.s32.totalorder %s37, 1
          %s577 = scalar_select %p576, %s37, 1
          %p578 = scmp.lt.s32.totalorder %s38, 0
          %s579 = scalar_select %p578, %s38, 0
          %s580 = sadd.s32 %s579, %s577
          %s581 = smul.addr %s580, 8
          %s582 = scalar_lea.vmem %s0, %s581
        $region84: #{tpu_custom_call.1} parent=79 // pred_fallthru
          _
        // Predicated region
        $region85: #{tpu_custom_call.1} parent=79 // pred_check
          %p583 = pneg %p90
        $region86: #{tpu_custom_call.1} parent=79 // pred_check_branch
          %585 = sbr.rel (%p583) target = $region88
        $region87: #{tpu_custom_call.1} parent=79 // pred_region
          %p586 = scmp.lt.s32.totalorder %s37, 1
          %s587 = scalar_select %p586, %s37, 1
          %s588 = smul.addr %s587, 8
          %s589 = scalar_lea.vmem %s1, %s588
        $region88: #{tpu_custom_call.1} parent=79 // pred_fallthru
          _
      $region80: #{tpu_custom_call.1} parent=5 // pred_fallthru
        _
      %p590 = scmp.le.s32.totalorder 1, %s30
      %p591 = scmp.lt.s32.totalorder %s30, 3
      %p592 = pnand %p590, %p591
      %p593 = pneg %p592
      // Predicated region
      $region89: #{tpu_custom_call.1} parent=5 // pred_check
        _
      $region90: #{tpu_custom_call.1} parent=5 // pred_check_branch
        %595 = sbr.rel (%p592) target = $region92
      $region91: #{tpu_custom_call.1} parent=5 // pred_region
        %s596 = ssub.s32 %s30, 1
        // Predicated region
        $region93: #{tpu_custom_call.1} parent=91 // pred_check
          %p597 = pneg %p159
        $region94: #{tpu_custom_call.1} parent=91 // pred_check_branch
          %599 = sbr.rel (%p597) target = $region96
        $region95: #{tpu_custom_call.1} parent=91 // pred_region
          %600 = dma.done [#allocation3], 256
        $region96: #{tpu_custom_call.1} parent=91 // pred_fallthru
          _
        // Predicated region
        $region97: #{tpu_custom_call.1} parent=91 // pred_check
          %p601 = pneg %p201
        $region98: #{tpu_custom_call.1} parent=91 // pred_check_branch
          %603 = sbr.rel (%p601) target = $region100
        $region99: #{tpu_custom_call.1} parent=91 // pred_region
          %604 = dma.done [#allocation6], 256
        $region100: #{tpu_custom_call.1} parent=91 // pred_fallthru
          _
        // Predicated region
        $region101: #{tpu_custom_call.1} parent=91 // pred_check
          %p605 = pneg %p222
        $region102: #{tpu_custom_call.1} parent=91 // pred_check_branch
          %607 = sbr.rel (%p605) target = $region104
        $region103: #{tpu_custom_call.1} parent=91 // pred_region
          %608 = dma.done [#allocation6], 16
        $region104: #{tpu_custom_call.1} parent=91 // pred_fallthru
          _
        // Predicated region
        $region105: #{tpu_custom_call.1} parent=91 // pred_check
          %p609 = pneg %p243
        $region106: #{tpu_custom_call.1} parent=91 // pred_check_branch
          %611 = sbr.rel (%p609) target = $region108
        $region107: #{tpu_custom_call.1} parent=91 // pred_region
          %612 = dma.done [#allocation9], 256
        $region108: #{tpu_custom_call.1} parent=91 // pred_fallthru
          _
        // Predicated region
        $region109: #{tpu_custom_call.1} parent=91 // pred_check
          %p613 = pneg %p264
        $region110: #{tpu_custom_call.1} parent=91 // pred_check_branch
          %615 = sbr.rel (%p613) target = $region112
        $region111: #{tpu_custom_call.1} parent=91 // pred_region
          %616 = dma.done [#allocation9], 16
        $region112: #{tpu_custom_call.1} parent=91 // pred_fallthru
          _
        %p617 = scmp.lt.s32.totalorder %s39, 1
        %s618 = scalar_select %p617, %s39, 1
        %p619 = scmp.lt.s32.totalorder %s40, 0
        %s620 = scalar_select %p619, %s40, 0
        %s621 = sadd.s32 %s620, %s618
        %s622 = smul.addr %s621, 8
        %s623 = scalar_lea.vmem %s0, %s622
        %p624 = pneg %p70
        %p625 = pneg %p67
        %p626 = scmp.lt.s32.totalorder %s39, 1
        %s627 = scalar_select %p626, %s39, 1
        %s628 = smul.addr %s627, 8
        %s629 = scalar_lea.vmem %s1, %s628
        %p630 = pneg %p96
        %p631 = pneg %p93
        %p632 = pneg %p117
        %p633 = pneg %p114
        %p634 = pneg %p138
        %p635 = pneg %p135
        %p636 = pneg %p159
        %p637 = pneg %p156
        %p638 = pneg %p180
        %p639 = pneg %p177
        %p640 = pneg %p201
        %p641 = pneg %p198
        %p642 = pneg %p222
        %p643 = pneg %p219
        %p644 = pneg %p243
        %p645 = pneg %p240
        %p646 = pneg %p264
        %p647 = pneg %p261
        %p648 = pneg %p285
        %p649 = pneg %p282
        %p650 = pneg %p306
        %p651 = pneg %p303
        %p652 = pneg %p327
        %p653 = pneg %p324
        %p654 = pneg %p348
        %p655 = pneg %p345
        %p656 = pneg %p369
        %p657 = pneg %p366
        %p658 = pneg %p390
        %p659 = pneg %p387
        %p660 = pneg %p411
        %p661 = pneg %p408
        %p662 = pneg %p432
        %p663 = pneg %p429
        %p664 = pneg %p460
        %p665 = pneg %p457
        %s666 = sand.u32 %s447, 1
        %s667 = scalar_lea.sflag [#allocation4], %s666
        %s668 = sand.u32 %s447, 1
        %s669 = smul.addr %s668, 8
        %s670 = scalar_lea.vmem [#allocation11], %s669
        %p671 = scmp.lt.s32.totalorder %s39, 1
        %s672 = scalar_select %p671, %s39, 1
        %p673 = scmp.lt.s32.totalorder %s40, 0
        %s674 = scalar_select %p673, %s40, 0
        %s675 = sadd.s32 %s674, %s672
        %s676 = smul.addr %s675, 8
        %s677 = scalar_lea.vmem %s0, %s676
        %p678 = scmp.lt.s32.totalorder %s39, 1
        %s679 = scalar_select %p678, %s39, 1
        %s680 = smul.addr %s679, 8
        %s681 = scalar_lea.vmem %s1, %s680
        %v683 = vld [vmem:[%s677] sm:$0xff]
        %v684 = vld [vmem:[%s681] sm:$0xff]
        %v685 = vpack.c.bf16 %v683, %v683
        %v686 = vpack.c.bf16 %v684, %v684
        %v687 = vld [vmem:[%s2] sm:$0xf]
        %v688 = vld [vmem:[%s2 + $0x4] sm:$0xf]
        %v689 = vld [vmem:[%s2 + $0x8] sm:$0xf]
        %v690 = vld [vmem:[%s2 + $0xc] sm:$0xf]
        %v691 = vld [vmem:[%s3] sm:$0x1]
        %v693 = vlaneseq
        %v694 = vshrl.u32 %v693, 7
        %v695 = vsub.s32 0, %v694
        %v696 = vrot.slane %v691, %v695
        %v702 = vunpack.c.l.b16 %v687
        %v703 = vunpack.c.l.b16 %v688
        %v704 = vunpack.c.l.b16 %v689
        %v705 = vunpack.c.l.b16 %v690
        %v706 = vpack.c.b16 %v703, %v702
        %v707 = vpack.c.b16 %v705, %v704
        %vm710 = vcmask 261120
        %v712 = vsel %vm710, %v685, 0
        %714 = vmatprep.subr.bf16.mxu0 0
        %715 = vmatpush1.bf16.msra.mxu0 %v706
        %716 = vmatprep.subr.bf16.mxu0 0
        %717 = vmatpush1.bf16.msra.mxu0 %v707
        %718 = vmatprep.subr.bf16.mxu0 0
        %719 = vmatpush1.bf16.msra.mxu0 0
        %720 = vmatprep.subr.bf16.mxu0 0
        %721 = vmatpush1.bf16.msra.mxu0 0
        %722 = vmatprep.subr.bf16.mxu0 0
        %723 = vmatpush1.bf16.msra.mxu0 0
        %724 = vmatprep.subr.bf16.mxu0 0
        %725 = vmatpush1.bf16.msra.mxu0 0
        %726 = vmatprep.subr.bf16.mxu0 0
        %727 = vmatpush1.bf16.msra.mxu0 0
        %728 = vmatprep.subr.bf16.mxu0 0
        %729 = vmatpush1.bf16.msra.mxu0 0
        %730 = vmatprep.subr.bf16.mxu0 0
        %731 = vmatpush1.bf16.msra.mxu0 0
        %732 = vmatprep.subr.bf16.mxu0 0
        %733 = vmatpush1.bf16.msra.mxu0 0
        %734 = vmatprep.subr.bf16.mxu0 0
        %735 = vmatpush1.bf16.msra.mxu0 0
        %736 = vmatprep.subr.bf16.mxu0 0
        %737 = vmatpush1.bf16.msra.mxu0 0
        %738 = vmatprep.subr.bf16.mxu0 0
        %739 = vmatpush1.bf16.msra.mxu0 0
        %740 = vmatprep.subr.bf16.mxu0 0
        %741 = vmatpush1.bf16.msra.mxu0 0
        %742 = vmatprep.subr.bf16.mxu0 0
        %743 = vmatpush1.bf16.msra.mxu0 0
        %744 = vmatprep.subr.bf16.mxu0 0
        %745 = vmatpush1.bf16.msra.mxu0 0
        %746 = vmatprep.mubr.bf16.mxu0 0
        %747 = vmatmul.mubr.bf16.gmra.mrb[0].mxu0 %v712
        %v748 = vpop.f32.mrb[0].mxu0
        %v749 = vadd.f32 %v696, %v748
        %v750 = vpop.f32.mrb[0].mxu0
        %v751 = vpop.f32.mrb[0].mxu0
        %v752 = vpop.f32.mrb[0].mxu0
        %753 = vdwg.mxu0
        %v754 = vld [vmem:[#allocation2] sm:$0xf]
        %v755 = vld [vmem:[#allocation2 + $0x4] sm:$0xf]
        %v756 = vld [vmem:[#allocation2 + $0x8] sm:$0xf]
        %v757 = vld [vmem:[#allocation2 + $0xc] sm:$0xf]
        %v758 = vld [vmem:[%s5] sm:$0x1]
        %v760 = vlaneseq
        %v761 = vshrl.u32 %v760, 7
        %v762 = vsub.s32 0, %v761
        %v763 = vrot.slane %v758, %v762
        %v769 = vunpack.c.l.b16 %v754
        %v770 = vunpack.c.l.b16 %v755
        %v771 = vunpack.c.l.b16 %v756
        %v772 = vunpack.c.l.b16 %v757
        %v773 = vpack.c.b16 %v770, %v769
        %v774 = vpack.c.b16 %v772, %v771
        %v778 = vsel %vm710, %v686, 0
        %780 = vmatprep.subr.bf16.mxu0 0
        %781 = vmatpush1.bf16.msra.mxu0 %v773
        %782 = vmatprep.subr.bf16.mxu0 0
        %783 = vmatpush1.bf16.msra.mxu0 %v774
        %784 = vmatprep.subr.bf16.mxu0 0
        %785 = vmatpush1.bf16.msra.mxu0 0
        %786 = vmatprep.subr.bf16.mxu0 0
        %787 = vmatpush1.bf16.msra.mxu0 0
        %788 = vmatprep.subr.bf16.mxu0 0
        %789 = vmatpush1.bf16.msra.mxu0 0
        %790 = vmatprep.subr.bf16.mxu0 0
        %791 = vmatpush1.bf16.msra.mxu0 0
        %792 = vmatprep.subr.bf16.mxu0 0
        %793 = vmatpush1.bf16.msra.mxu0 0
        %794 = vmatprep.subr.bf16.mxu0 0
        %795 = vmatpush1.bf16.msra.mxu0 0
        %796 = vmatprep.subr.bf16.mxu0 0
        %797 = vmatpush1.bf16.msra.mxu0 0
        %798 = vmatprep.subr.bf16.mxu0 0
        %799 = vmatpush1.bf16.msra.mxu0 0
        %800 = vmatprep.subr.bf16.mxu0 0
        %801 = vmatpush1.bf16.msra.mxu0 0
        %802 = vmatprep.subr.bf16.mxu0 0
        %803 = vmatpush1.bf16.msra.mxu0 0
        %804 = vmatprep.subr.bf16.mxu0 0
        %805 = vmatpush1.bf16.msra.mxu0 0
        %806 = vmatprep.subr.bf16.mxu0 0
        %807 = vmatpush1.bf16.msra.mxu0 0
        %808 = vmatprep.subr.bf16.mxu0 0
        %809 = vmatpush1.bf16.msra.mxu0 0
        %810 = vmatprep.subr.bf16.mxu0 0
        %811 = vmatpush1.bf16.msra.mxu0 0
        %812 = vmatprep.mubr.bf16.mxu0 0
        %813 = vmatmul.mubr.bf16.gmra.mrb[0].mxu0 %v778
        %v814 = vpop.f32.mrb[0].mxu0
        %v815 = vadd.f32 %v763, %v814
        %v816 = vpop.f32.mrb[0].mxu0
        %v817 = vpop.f32.mrb[0].mxu0
        %v818 = vpop.f32.mrb[0].mxu0
        %819 = vdwg.mxu0
        %v820 = vld [vmem:[#allocation5] sm:$0xf]
        %v821 = vld [vmem:[#allocation5 + $0x4] sm:$0xf]
        %v822 = vld [vmem:[#allocation5 + $0x8] sm:$0xf]
        %v823 = vld [vmem:[#allocation5 + $0xc] sm:$0xf]
        %v824 = vld [vmem:[#allocation7] sm:$0x1]
        %v826 = vlaneseq
        %v827 = vshrl.u32 %v826, 7
        %v828 = vsub.s32 0, %v827
        %v829 = vrot.slane %v824, %v828
        %v835 = vunpack.c.l.b16 %v820
        %v836 = vunpack.c.l.b16 %v821
        %v837 = vunpack.c.l.b16 %v822
        %v838 = vunpack.c.l.b16 %v823
        %v839 = vpack.c.b16 %v836, %v835
        %v840 = vpack.c.b16 %v838, %v837
        %843 = vmatprep.subr.bf16.mxu0 0
        %844 = vmatpush1.bf16.msra.mxu0 %v839
        %845 = vmatprep.subr.bf16.mxu0 0
        %846 = vmatpush1.bf16.msra.mxu0 %v840
        %847 = vmatprep.subr.bf16.mxu0 0
        %848 = vmatpush1.bf16.msra.mxu0 0
        %849 = vmatprep.subr.bf16.mxu0 0
        %850 = vmatpush1.bf16.msra.mxu0 0
        %851 = vmatprep.subr.bf16.mxu0 0
        %852 = vmatpush1.bf16.msra.mxu0 0
        %853 = vmatprep.subr.bf16.mxu0 0
        %854 = vmatpush1.bf16.msra.mxu0 0
        %855 = vmatprep.subr.bf16.mxu0 0
        %856 = vmatpush1.bf16.msra.mxu0 0
        %857 = vmatprep.subr.bf16.mxu0 0
        %858 = vmatpush1.bf16.msra.mxu0 0
        %859 = vmatprep.subr.bf16.mxu0 0
        %860 = vmatpush1.bf16.msra.mxu0 0
        %861 = vmatprep.subr.bf16.mxu0 0
        %862 = vmatpush1.bf16.msra.mxu0 0
        %863 = vmatprep.subr.bf16.mxu0 0
        %864 = vmatpush1.bf16.msra.mxu0 0
        %865 = vmatprep.subr.bf16.mxu0 0
        %866 = vmatpush1.bf16.msra.mxu0 0
        %867 = vmatprep.subr.bf16.mxu0 0
        %868 = vmatpush1.bf16.msra.mxu0 0
        %869 = vmatprep.subr.bf16.mxu0 0
        %870 = vmatpush1.bf16.msra.mxu0 0
        %871 = vmatprep.subr.bf16.mxu0 0
        %872 = vmatpush1.bf16.msra.mxu0 0
        %873 = vmatprep.subr.bf16.mxu0 0
        %874 = vmatpush1.bf16.msra.mxu0 0
        %875 = vmatprep.mubr.bf16.mxu0 0
        %876 = vmatmul.mubr.bf16.gmra.mrb[0].mxu0 %v778
        %v877 = vpop.f32.mrb[0].mxu0
        %v878 = vadd.f32 %v829, %v877
        %v879 = vpop.f32.mrb[0].mxu0
        %v880 = vpop.f32.mrb[0].mxu0
        %v881 = vpop.f32.mrb[0].mxu0
        %882 = vdwg.mxu0
        %v883 = vpack.c.bf16 %v749, %v749
        %v884 = vpack.c.bf16 %v815, %v815
        %v885 = vpack.c.bf16 %v878, %v878
        %887 = vrot.lane.b32.xlu0 %v883, 120
        %v888 = vpop.permute.xlu0 %887
        %889 = vrot.lane.b32.xlu0 %v883, 112
        %v890 = vpop.permute.xlu0 %889
        %891 = vrot.lane.b32.xlu0 %v883, 104
        %v892 = vpop.permute.xlu0 %891
        %894 = vrot.lane.b32.xlu0 %v884, 120
        %v895 = vpop.permute.xlu0 %894
        %896 = vrot.lane.b32.xlu0 %v884, 112
        %v897 = vpop.permute.xlu0 %896
        %898 = vrot.lane.b32.xlu0 %v884, 104
        %v899 = vpop.permute.xlu0 %898
        %901 = vrot.lane.b32.xlu0 %v885, 120
        %v902 = vpop.permute.xlu0 %901
        %903 = vrot.lane.b32.xlu0 %v885, 112
        %v904 = vpop.permute.xlu0 %903
        %905 = vrot.lane.b32.xlu0 %v885, 104
        %v906 = vpop.permute.xlu0 %905
        %vm907 = vcmask 64512
        %v909 = vsel %vm907, %v883, 0
        %v912 = vsel %vm907, %v884, 0
        %914 = vmatprep.subr.bf16.mxu0 0
        %915 = vmatpush1.bf16.xpose.msra.mxu0 %v912
        %916 = vmatprep.subr.bf16.mxu0 0
        %917 = vmatpush1.bf16.xpose.msra.mxu0 0
        %918 = vmatprep.subr.bf16.mxu0 0
        %919 = vmatpush1.bf16.xpose.msra.mxu0 0
        %920 = vmatprep.subr.bf16.mxu0 0
        %921 = vmatpush1.bf16.xpose.msra.mxu0 0
        %922 = vmatprep.subr.bf16.mxu0 0
        %923 = vmatpush1.bf16.xpose.msra.mxu0 0
        %924 = vmatprep.subr.bf16.mxu0 0
        %925 = vmatpush1.bf16.xpose.msra.mxu0 0
        %926 = vmatprep.subr.bf16.mxu0 0
        %927 = vmatpush1.bf16.xpose.msra.mxu0 0
        %928 = vmatprep.subr.bf16.mxu0 0
        %929 = vmatpush1.bf16.xpose.msra.mxu0 0
        %930 = vmatprep.subr.bf16.mxu0 0
        %931 = vmatpush1.bf16.xpose.msra.mxu0 0
        %932 = vmatprep.subr.bf16.mxu0 0
        %933 = vmatpush1.bf16.xpose.msra.mxu0 0
        %934 = vmatprep.subr.bf16.mxu0 0
        %935 = vmatpush1.bf16.xpose.msra.mxu0 0
        %936 = vmatprep.subr.bf16.mxu0 0
        %937 = vmatpush1.bf16.xpose.msra.mxu0 0
        %938 = vmatprep.subr.bf16.mxu0 0
        %939 = vmatpush1.bf16.xpose.msra.mxu0 0
        %940 = vmatprep.subr.bf16.mxu0 0
        %941 = vmatpush1.bf16.xpose.msra.mxu0 0
        %942 = vmatprep.subr.bf16.mxu0 0
        %943 = vmatpush1.bf16.xpose.msra.mxu0 0
        %944 = vmatprep.subr.bf16.mxu0 0
        %945 = vmatpush1.bf16.xpose.msra.mxu0 0
        %946 = vmatprep.mubr.bf16.mxu0 0
        %947 = vmatmul.mubr.bf16.gmra.mrb[0].mxu0 %v909
        %v948 = vpop.f32.mrb[0].mxu0
        %v949 = vadd.f32 0.0, %v948
        %v950 = vpop.f32.mrb[0].mxu0
        %v951 = vpop.f32.mrb[0].mxu0
        %v952 = vpop.f32.mrb[0].mxu0
        %953 = vdwg.mxu0
        %v955 = vsel %vm907, %v888, 0
        %v958 = vsel %vm907, %v895, 0
        %960 = vmatprep.subr.bf16.mxu0 0
        %961 = vmatpush1.bf16.xpose.msra.mxu0 %v958
        %962 = vmatprep.subr.bf16.mxu0 0
        %963 = vmatpush1.bf16.xpose.msra.mxu0 0
        %964 = vmatprep.subr.bf16.mxu0 0
        %965 = vmatpush1.bf16.xpose.msra.mxu0 0
        %966 = vmatprep.subr.bf16.mxu0 0
        %967 = vmatpush1.bf16.xpose.msra.mxu0 0
        %968 = vmatprep.subr.bf16.mxu0 0
        %969 = vmatpush1.bf16.xpose.msra.mxu0 0
        %970 = vmatprep.subr.bf16.mxu0 0
        %971 = vmatpush1.bf16.xpose.msra.mxu0 0
        %972 = vmatprep.subr.bf16.mxu0 0
        %973 = vmatpush1.bf16.xpose.msra.mxu0 0
        %974 = vmatprep.subr.bf16.mxu0 0
        %975 = vmatpush1.bf16.xpose.msra.mxu0 0
        %976 = vmatprep.subr.bf16.mxu0 0
        %977 = vmatpush1.bf16.xpose.msra.mxu0 0
        %978 = vmatprep.subr.bf16.mxu0 0
        %979 = vmatpush1.bf16.xpose.msra.mxu0 0
        %980 = vmatprep.subr.bf16.mxu0 0
        %981 = vmatpush1.bf16.xpose.msra.mxu0 0
        %982 = vmatprep.subr.bf16.mxu0 0
        %983 = vmatpush1.bf16.xpose.msra.mxu0 0
        %984 = vmatprep.subr.bf16.mxu0 0
        %985 = vmatpush1.bf16.xpose.msra.mxu0 0
        %986 = vmatprep.subr.bf16.mxu0 0
        %987 = vmatpush1.bf16.xpose.msra.mxu0 0
        %988 = vmatprep.subr.bf16.mxu0 0
        %989 = vmatpush1.bf16.xpose.msra.mxu0 0
        %990 = vmatprep.subr.bf16.mxu0 0
        %991 = vmatpush1.bf16.xpose.msra.mxu0 0
        %992 = vmatprep.mubr.bf16.mxu0 0
        %993 = vmatmul.mubr.bf16.gmra.mrb[0].mxu0 %v955
        %v994 = vpop.f32.mrb[0].mxu0
        %v995 = vadd.f32 0.0, %v994
        %v996 = vpop.f32.mrb[0].mxu0
        %v997 = vpop.f32.mrb[0].mxu0
        %v998 = vpop.f32.mrb[0].mxu0
        %999 = vdwg.mxu0
        %v1001 = vsel %vm907, %v890, 0
        %v1004 = vsel %vm907, %v897, 0
        %1006 = vmatprep.subr.bf16.mxu0 0
        %1007 = vmatpush1.bf16.xpose.msra.mxu0 %v1004
        %1008 = vmatprep.subr.bf16.mxu0 0
        %1009 = vmatpush1.bf16.xpose.msra.mxu0 0
        %1010 = vmatprep.subr.bf16.mxu0 0
        %1011 = vmatpush1.bf16.xpose.msra.mxu0 0
        %1012 = vmatprep.subr.bf16.mxu0 0
        %1013 = vmatpush1.bf16.xpose.msra.mxu0 0
        %1014 = vmatprep.subr.bf16.mxu0 0
        %1015 = vmatpush1.bf16.xpose.msra.mxu0 0
        %1016 = vmatprep.subr.bf16.mxu0 0
        %1017 = vmatpush1.bf16.xpose.msra.mxu0 0
        %1018 = vmatprep.subr.bf16.mxu0 0
        %1019 = vmatpush1.bf16.xpose.msra.mxu0 0
        %1020 = vmatprep.subr.bf16.mxu0 0
        %1021 = vmatpush1.bf16.xpose.msra.mxu0 0
        %1022 = vmatprep.subr.bf16.mxu0 0
        %1023 = vmatpush1.bf16.xpose.msra.mxu0 0
        %1024 = vmatprep.subr.bf16.mxu0 0
        %1025 = vmatpush1.bf16.xpose.msra.mxu0 0
        %1026 = vmatprep.subr.bf16.mxu0 0
        %1027 = vmatpush1.bf16.xpose.msra.mxu0 0
        %1028 = vmatprep.subr.bf16.mxu0 0
        %1029 = vmatpush1.bf16.xpose.msra.mxu0 0
        %1030 = vmatprep.subr.bf16.mxu0 0
        %1031 = vmatpush1.bf16.xpose.msra.mxu0 0
        %1032 = vmatprep.subr.bf16.mxu0 0
        %1033 = vmatpush1.bf16.xpose.msra.mxu0 0
        %1034 = vmatprep.subr.bf16.mxu0 0
        %1035 = vmatpush1.bf16.xpose.msra.mxu0 0
        %1036 = vmatprep.subr.bf16.mxu0 0
        %1037 = vmatpush1.bf16.xpose.msra.mxu0 0
        %1038 = vmatprep.mubr.bf16.mxu0 0
        %1039 = vmatmul.mubr.bf16.gmra.mrb[0].mxu0 %v1001
        %v1040 = vpop.f32.mrb[0].mxu0
        %v1041 = vadd.f32 0.0, %v1040
        %v1042 = vpop.f32.mrb[0].mxu0
        %v1043 = vpop.f32.mrb[0].mxu0
        %v1044 = vpop.f32.mrb[0].mxu0
        %1045 = vdwg.mxu0
        %v1047 = vsel %vm907, %v892, 0
        %v1050 = vsel %vm907, %v899, 0
        %1052 = vmatprep.subr.bf16.mxu0 0
        %1053 = vmatpush1.bf16.xpose.msra.mxu0 %v1050
        %1054 = vmatprep.subr.bf16.mxu0 0
        %1055 = vmatpush1.bf16.xpose.msra.mxu0 0
        %1056 = vmatprep.subr.bf16.mxu0 0
        %1057 = vmatpush1.bf16.xpose.msra.mxu0 0
        %1058 = vmatprep.subr.bf16.mxu0 0
        %1059 = vmatpush1.bf16.xpose.msra.mxu0 0
        %1060 = vmatprep.subr.bf16.mxu0 0
        %1061 = vmatpush1.bf16.xpose.msra.mxu0 0
        %1062 = vmatprep.subr.bf16.mxu0 0
        %1063 = vmatpush1.bf16.xpose.msra.mxu0 0
        %1064 = vmatprep.subr.bf16.mxu0 0
        %1065 = vmatpush1.bf16.xpose.msra.mxu0 0
        %1066 = vmatprep.subr.bf16.mxu0 0
        %1067 = vmatpush1.bf16.xpose.msra.mxu0 0
        %1068 = vmatprep.subr.bf16.mxu0 0
        %1069 = vmatpush1.bf16.xpose.msra.mxu0 0
        %1070 = vmatprep.subr.bf16.mxu0 0
        %1071 = vmatpush1.bf16.xpose.msra.mxu0 0
        %1072 = vmatprep.subr.bf16.mxu0 0
        %1073 = vmatpush1.bf16.xpose.msra.mxu0 0
        %1074 = vmatprep.subr.bf16.mxu0 0
        %1075 = vmatpush1.bf16.xpose.msra.mxu0 0
        %1076 = vmatprep.subr.bf16.mxu0 0
        %1077 = vmatpush1.bf16.xpose.msra.mxu0 0
        %1078 = vmatprep.subr.bf16.mxu0 0
        %1079 = vmatpush1.bf16.xpose.msra.mxu0 0
        %1080 = vmatprep.subr.bf16.mxu0 0
        %1081 = vmatpush1.bf16.xpose.msra.mxu0 0
        %1082 = vmatprep.subr.bf16.mxu0 0
        %1083 = vmatpush1.bf16.xpose.msra.mxu0 0
        %1084 = vmatprep.mubr.bf16.mxu0 0
        %1085 = vmatmul.mubr.bf16.gmra.mrb[0].mxu0 %v1047
        %v1086 = vpop.f32.mrb[0].mxu0
        %v1087 = vadd.f32 0.0, %v1086
        %v1088 = vpop.f32.mrb[0].mxu0
        %v1089 = vpop.f32.mrb[0].mxu0
        %v1090 = vpop.f32.mrb[0].mxu0
        %1091 = vdwg.mxu0
        %v1092 = vsel %vm907, %v949, -inf
        %1093 = vmax.xlane.f32.xlu0 %v1092
        %v1094 = vpop.xlane.xlu0 %1093
        %v1095 = vsel %vm907, %v995, -inf
        %1096 = vmax.xlane.f32.xlu0 %v1095
        %v1097 = vpop.xlane.xlu0 %1096
        %v1098 = vsel %vm907, %v1041, -inf
        %1099 = vmax.xlane.f32.xlu0 %v1098
        %v1100 = vpop.xlane.xlu0 %1099
        %v1101 = vsel %vm907, %v1087, -inf
        %1102 = vmax.xlane.f32.xlu0 %v1101
        %v1103 = vpop.xlane.xlu0 %1102
        %v1104 = vsub.f32 %v949, %v1094
        %v1105 = vsub.f32 %v995, %v1097
        %v1106 = vsub.f32 %v1041, %v1100
        %v1107 = vsub.f32 %v1087, %v1103
        %v1108 = vmul.f32 %v1104, 1.442695
        %v1109 = vpow.pop %v1108
        %v1110 = vmul.f32 %v1105, 1.442695
        %v1111 = vpow.pop %v1110
        %v1112 = vmul.f32 %v1106, 1.442695
        %v1113 = vpow.pop %v1112
        %v1114 = vmul.f32 %v1107, 1.442695
        %v1115 = vpow.pop %v1114
        %v1116 = vsel %vm907, %v1109, 0.0
        %1117 = vadd.xlane.f32.xlu0 %v1116
        %v1118 = vpop.xlane.xlu0 %1117
        %v1119 = vsel %vm907, %v1111, 0.0
        %1120 = vadd.xlane.f32.xlu0 %v1119
        %v1121 = vpop.xlane.xlu0 %1120
        %v1122 = vsel %vm907, %v1113, 0.0
        %1123 = vadd.xlane.f32.xlu0 %v1122
        %v1124 = vpop.xlane.xlu0 %1123
        %v1125 = vsel %vm907, %v1115, 0.0
        %1126 = vadd.xlane.f32.xlu0 %v1125
        %v1127 = vpop.xlane.xlu0 %1126
        %v1128 = vpack.c.bf16 %v1109, %v1109
        %v1129 = vpack.c.bf16 %v1111, %v1111
        %v1130 = vpack.c.bf16 %v1113, %v1113
        %v1131 = vpack.c.bf16 %v1115, %v1115
        %v1133 = vsel %vm907, %v1128, 0
        %vm1135 = vcmask 1043456
        %v1137 = vsel %vm1135, %v885, 0
        %1139 = vmatprep.subr.bf16.mxu0 0
        %1140 = vmatpush1.bf16.msra.mxu0 %v1137
        %1141 = vmatprep.subr.bf16.mxu0 0
        %1142 = vmatpush1.bf16.msra.mxu0 0
        %1143 = vmatprep.subr.bf16.mxu0 0
        %1144 = vmatpush1.bf16.msra.mxu0 0
        %1145 = vmatprep.subr.bf16.mxu0 0
        %1146 = vmatpush1.bf16.msra.mxu0 0
        %1147 = vmatprep.subr.bf16.mxu0 0
        %1148 = vmatpush1.bf16.msra.mxu0 0
        %1149 = vmatprep.subr.bf16.mxu0 0
        %1150 = vmatpush1.bf16.msra.mxu0 0
        %1151 = vmatprep.subr.bf16.mxu0 0
        %1152 = vmatpush1.bf16.msra.mxu0 0
        %1153 = vmatprep.subr.bf16.mxu0 0
        %1154 = vmatpush1.bf16.msra.mxu0 0
        %1155 = vmatprep.subr.bf16.mxu0 0
        %1156 = vmatpush1.bf16.msra.mxu0 0
        %1157 = vmatprep.subr.bf16.mxu0 0
        %1158 = vmatpush1.bf16.msra.mxu0 0
        %1159 = vmatprep.subr.bf16.mxu0 0
        %1160 = vmatpush1.bf16.msra.mxu0 0
        %1161 = vmatprep.subr.bf16.mxu0 0
        %1162 = vmatpush1.bf16.msra.mxu0 0
        %1163 = vmatprep.subr.bf16.mxu0 0
        %1164 = vmatpush1.bf16.msra.mxu0 0
        %1165 = vmatprep.subr.bf16.mxu0 0
        %1166 = vmatpush1.bf16.msra.mxu0 0
        %1167 = vmatprep.subr.bf16.mxu0 0
        %1168 = vmatpush1.bf16.msra.mxu0 0
        %1169 = vmatprep.subr.bf16.mxu0 0
        %1170 = vmatpush1.bf16.msra.mxu0 0
        %1171 = vmatprep.mubr.bf16.mxu0 0
        %1172 = vmatmul.mubr.bf16.gmra.mrb[0].mxu0 %v1133
        %v1173 = vpop.f32.mrb[0].mxu0
        %v1174 = vadd.f32 0.0, %v1173
        %v1175 = vpop.f32.mrb[0].mxu0
        %v1176 = vpop.f32.mrb[0].mxu0
        %v1177 = vpop.f32.mrb[0].mxu0
        %1178 = vdwg.mxu0
        %v1180 = vsel %vm907, %v1129, 0
        %v1183 = vsel %vm1135, %v902, 0
        %1185 = vmatprep.subr.bf16.mxu0 0
        %1186 = vmatpush1.bf16.msra.mxu0 %v1183
        %1187 = vmatprep.subr.bf16.mxu0 0
        %1188 = vmatpush1.bf16.msra.mxu0 0
        %1189 = vmatprep.subr.bf16.mxu0 0
        %1190 = vmatpush1.bf16.msra.mxu0 0
        %1191 = vmatprep.subr.bf16.mxu0 0
        %1192 = vmatpush1.bf16.msra.mxu0 0
        %1193 = vmatprep.subr.bf16.mxu0 0
        %1194 = vmatpush1.bf16.msra.mxu0 0
        %1195 = vmatprep.subr.bf16.mxu0 0
        %1196 = vmatpush1.bf16.msra.mxu0 0
        %1197 = vmatprep.subr.bf16.mxu0 0
        %1198 = vmatpush1.bf16.msra.mxu0 0
        %1199 = vmatprep.subr.bf16.mxu0 0
        %1200 = vmatpush1.bf16.msra.mxu0 0
        %1201 = vmatprep.subr.bf16.mxu0 0
        %1202 = vmatpush1.bf16.msra.mxu0 0
        %1203 = vmatprep.subr.bf16.mxu0 0
        %1204 = vmatpush1.bf16.msra.mxu0 0
        %1205 = vmatprep.subr.bf16.mxu0 0
        %1206 = vmatpush1.bf16.msra.mxu0 0
        %1207 = vmatprep.subr.bf16.mxu0 0
        %1208 = vmatpush1.bf16.msra.mxu0 0
        %1209 = vmatprep.subr.bf16.mxu0 0
        %1210 = vmatpush1.bf16.msra.mxu0 0
        %1211 = vmatprep.subr.bf16.mxu0 0
        %1212 = vmatpush1.bf16.msra.mxu0 0
        %1213 = vmatprep.subr.bf16.mxu0 0
        %1214 = vmatpush1.bf16.msra.mxu0 0
        %1215 = vmatprep.subr.bf16.mxu0 0
        %1216 = vmatpush1.bf16.msra.mxu0 0
        %1217 = vmatprep.mubr.bf16.mxu0 0
        %1218 = vmatmul.mubr.bf16.gmra.mrb[0].mxu0 %v1180
        %v1219 = vpop.f32.mrb[0].mxu0
        %v1220 = vadd.f32 0.0, %v1219
        %v1221 = vpop.f32.mrb[0].mxu0
        %v1222 = vpop.f32.mrb[0].mxu0
        %v1223 = vpop.f32.mrb[0].mxu0
        %1224 = vdwg.mxu0
        %v1226 = vsel %vm907, %v1130, 0
        %v1229 = vsel %vm1135, %v904, 0
        %1231 = vmatprep.subr.bf16.mxu0 0
        %1232 = vmatpush1.bf16.msra.mxu0 %v1229
        %1233 = vmatprep.subr.bf16.mxu0 0
        %1234 = vmatpush1.bf16.msra.mxu0 0
        %1235 = vmatprep.subr.bf16.mxu0 0
        %1236 = vmatpush1.bf16.msra.mxu0 0
        %1237 = vmatprep.subr.bf16.mxu0 0
        %1238 = vmatpush1.bf16.msra.mxu0 0
        %1239 = vmatprep.subr.bf16.mxu0 0
        %1240 = vmatpush1.bf16.msra.mxu0 0
        %1241 = vmatprep.subr.bf16.mxu0 0
        %1242 = vmatpush1.bf16.msra.mxu0 0
        %1243 = vmatprep.subr.bf16.mxu0 0
        %1244 = vmatpush1.bf16.msra.mxu0 0
        %1245 = vmatprep.subr.bf16.mxu0 0
        %1246 = vmatpush1.bf16.msra.mxu0 0
        %1247 = vmatprep.subr.bf16.mxu0 0
        %1248 = vmatpush1.bf16.msra.mxu0 0
        %1249 = vmatprep.subr.bf16.mxu0 0
        %1250 = vmatpush1.bf16.msra.mxu0 0
        %1251 = vmatprep.subr.bf16.mxu0 0
        %1252 = vmatpush1.bf16.msra.mxu0 0
        %1253 = vmatprep.subr.bf16.mxu0 0
        %1254 = vmatpush1.bf16.msra.mxu0 0
        %1255 = vmatprep.subr.bf16.mxu0 0
        %1256 = vmatpush1.bf16.msra.mxu0 0
        %1257 = vmatprep.subr.bf16.mxu0 0
        %1258 = vmatpush1.bf16.msra.mxu0 0
        %1259 = vmatprep.subr.bf16.mxu0 0
        %1260 = vmatpush1.bf16.msra.mxu0 0
        %1261 = vmatprep.subr.bf16.mxu0 0
        %1262 = vmatpush1.bf16.msra.mxu0 0
        %1263 = vmatprep.mubr.bf16.mxu0 0
        %1264 = vmatmul.mubr.bf16.gmra.mrb[0].mxu0 %v1226
        %v1265 = vpop.f32.mrb[0].mxu0
        %v1266 = vadd.f32 0.0, %v1265
        %v1267 = vpop.f32.mrb[0].mxu0
        %v1268 = vpop.f32.mrb[0].mxu0
        %v1269 = vpop.f32.mrb[0].mxu0
        %1270 = vdwg.mxu0
        %v1272 = vsel %vm907, %v1131, 0
        %v1275 = vsel %vm1135, %v906, 0
        %1277 = vmatprep.subr.bf16.mxu0 0
        %1278 = vmatpush1.bf16.msra.mxu0 %v1275
        %1279 = vmatprep.subr.bf16.mxu0 0
        %1280 = vmatpush1.bf16.msra.mxu0 0
        %1281 = vmatprep.subr.bf16.mxu0 0
        %1282 = vmatpush1.bf16.msra.mxu0 0
        %1283 = vmatprep.subr.bf16.mxu0 0
        %1284 = vmatpush1.bf16.msra.mxu0 0
        %1285 = vmatprep.subr.bf16.mxu0 0
        %1286 = vmatpush1.bf16.msra.mxu0 0
        %1287 = vmatprep.subr.bf16.mxu0 0
        %1288 = vmatpush1.bf16.msra.mxu0 0
        %1289 = vmatprep.subr.bf16.mxu0 0
        %1290 = vmatpush1.bf16.msra.mxu0 0
        %1291 = vmatprep.subr.bf16.mxu0 0
        %1292 = vmatpush1.bf16.msra.mxu0 0
        %1293 = vmatprep.subr.bf16.mxu0 0
        %1294 = vmatpush1.bf16.msra.mxu0 0
        %1295 = vmatprep.subr.bf16.mxu0 0
        %1296 = vmatpush1.bf16.msra.mxu0 0
        %1297 = vmatprep.subr.bf16.mxu0 0
        %1298 = vmatpush1.bf16.msra.mxu0 0
        %1299 = vmatprep.subr.bf16.mxu0 0
        %1300 = vmatpush1.bf16.msra.mxu0 0
        %1301 = vmatprep.subr.bf16.mxu0 0
        %1302 = vmatpush1.bf16.msra.mxu0 0
        %1303 = vmatprep.subr.bf16.mxu0 0
        %1304 = vmatpush1.bf16.msra.mxu0 0
        %1305 = vmatprep.subr.bf16.mxu0 0
        %1306 = vmatpush1.bf16.msra.mxu0 0
        %1307 = vmatprep.subr.bf16.mxu0 0
        %1308 = vmatpush1.bf16.msra.mxu0 0
        %1309 = vmatprep.mubr.bf16.mxu0 0
        %1310 = vmatmul.mubr.bf16.gmra.mrb[0].mxu0 %v1272
        %v1311 = vpop.f32.mrb[0].mxu0
        %v1312 = vadd.f32 0.0, %v1311
        %v1313 = vpop.f32.mrb[0].mxu0
        %v1314 = vpop.f32.mrb[0].mxu0
        %v1315 = vpop.f32.mrb[0].mxu0
        %1316 = vdwg.mxu0
        %v1317 = vrcp.pop %v1118
        %v1318 = vrcp.pop %v1121
        %v1319 = vrcp.pop %v1124
        %v1320 = vrcp.pop %v1127
        %v1321 = vmul.f32 %v1174, %v1317
        %v1322 = vmul.f32 %v1220, %v1318
        %v1323 = vmul.f32 %v1266, %v1319
        %v1324 = vmul.f32 %v1312, %v1320
        %v1325 = vpack.c.bf16 %v1321, %v1321
        %v1326 = vpack.c.bf16 %v1322, %v1322
        %v1327 = vpack.c.bf16 %v1323, %v1323
        %v1328 = vpack.c.bf16 %v1324, %v1324
        %v1329 = vld [vmem:[#allocation8] sm:$0xf]
        %v1330 = vld [vmem:[#allocation8 + $0x4] sm:$0xf]
        %v1331 = vld [vmem:[#allocation8 + $0x8] sm:$0xf]
        %v1332 = vld [vmem:[#allocation8 + $0xc] sm:$0xf]
        %v1334 = vsel %vm907, %v1325, 0
        %v1337 = vsel %vm1135, %v1329, 0
        %1339 = vmatprep.subr.bf16.mxu0 0
        %1340 = vmatpush1.bf16.msra.mxu0 %v1337
        %1341 = vmatprep.subr.bf16.mxu0 0
        %1342 = vmatpush1.bf16.msra.mxu0 0
        %1343 = vmatprep.subr.bf16.mxu0 0
        %1344 = vmatpush1.bf16.msra.mxu0 0
        %1345 = vmatprep.subr.bf16.mxu0 0
        %1346 = vmatpush1.bf16.msra.mxu0 0
        %1347 = vmatprep.subr.bf16.mxu0 0
        %1348 = vmatpush1.bf16.msra.mxu0 0
        %1349 = vmatprep.subr.bf16.mxu0 0
        %1350 = vmatpush1.bf16.msra.mxu0 0
        %1351 = vmatprep.subr.bf16.mxu0 0
        %1352 = vmatpush1.bf16.msra.mxu0 0
        %1353 = vmatprep.subr.bf16.mxu0 0
        %1354 = vmatpush1.bf16.msra.mxu0 0
        %1355 = vmatprep.subr.bf16.mxu0 0
        %1356 = vmatpush1.bf16.msra.mxu0 0
        %1357 = vmatprep.subr.bf16.mxu0 0
        %1358 = vmatpush1.bf16.msra.mxu0 0
        %1359 = vmatprep.subr.bf16.mxu0 0
        %1360 = vmatpush1.bf16.msra.mxu0 0
        %1361 = vmatprep.subr.bf16.mxu0 0
        %1362 = vmatpush1.bf16.msra.mxu0 0
        %1363 = vmatprep.subr.bf16.mxu0 0
        %1364 = vmatpush1.bf16.msra.mxu0 0
        %1365 = vmatprep.subr.bf16.mxu0 0
        %1366 = vmatpush1.bf16.msra.mxu0 0
        %1367 = vmatprep.subr.bf16.mxu0 0
        %1368 = vmatpush1.bf16.msra.mxu0 0
        %1369 = vmatprep.subr.bf16.mxu0 0
        %1370 = vmatpush1.bf16.msra.mxu0 0
        %1371 = vmatprep.mubr.bf16.mxu0 0
        %1372 = vmatmul.mubr.bf16.gmra.mrb[0].mxu0 %v1334
        %v1373 = vpop.f32.mrb[0].mxu0
        %v1374 = vadd.f32 0.0, %v1373
        %v1375 = vpop.f32.mrb[0].mxu0
        %v1376 = vpop.f32.mrb[0].mxu0
        %v1377 = vpop.f32.mrb[0].mxu0
        %1378 = vdwg.mxu0
        %v1380 = vsel %vm907, %v1326, 0
        %v1383 = vsel %vm1135, %v1330, 0
        %1385 = vmatprep.subr.bf16.mxu0 0
        %1386 = vmatpush1.bf16.msra.mxu0 %v1383
        %1387 = vmatprep.subr.bf16.mxu0 0
        %1388 = vmatpush1.bf16.msra.mxu0 0
        %1389 = vmatprep.subr.bf16.mxu0 0
        %1390 = vmatpush1.bf16.msra.mxu0 0
        %1391 = vmatprep.subr.bf16.mxu0 0
        %1392 = vmatpush1.bf16.msra.mxu0 0
        %1393 = vmatprep.subr.bf16.mxu0 0
        %1394 = vmatpush1.bf16.msra.mxu0 0
        %1395 = vmatprep.subr.bf16.mxu0 0
        %1396 = vmatpush1.bf16.msra.mxu0 0
        %1397 = vmatprep.subr.bf16.mxu0 0
        %1398 = vmatpush1.bf16.msra.mxu0 0
        %1399 = vmatprep.subr.bf16.mxu0 0
        %1400 = vmatpush1.bf16.msra.mxu0 0
        %1401 = vmatprep.subr.bf16.mxu0 0
        %1402 = vmatpush1.bf16.msra.mxu0 0
        %1403 = vmatprep.subr.bf16.mxu0 0
        %1404 = vmatpush1.bf16.msra.mxu0 0
        %1405 = vmatprep.subr.bf16.mxu0 0
        %1406 = vmatpush1.bf16.msra.mxu0 0
        %1407 = vmatprep.subr.bf16.mxu0 0
        %1408 = vmatpush1.bf16.msra.mxu0 0
        %1409 = vmatprep.subr.bf16.mxu0 0
        %1410 = vmatpush1.bf16.msra.mxu0 0
        %1411 = vmatprep.subr.bf16.mxu0 0
        %1412 = vmatpush1.bf16.msra.mxu0 0
        %1413 = vmatprep.subr.bf16.mxu0 0
        %1414 = vmatpush1.bf16.msra.mxu0 0
        %1415 = vmatprep.subr.bf16.mxu0 0
        %1416 = vmatpush1.bf16.msra.mxu0 0
        %1417 = vmatprep.mubr.bf16.mxu0 0
        %1418 = vmatmul.mubr.bf16.gmra.mrb[0].mxu0 %v1380
        %v1419 = vpop.f32.mrb[0].mxu0
        %v1420 = vadd.f32 0.0, %v1419
        %v1421 = vpop.f32.mrb[0].mxu0
        %v1422 = vpop.f32.mrb[0].mxu0
        %v1423 = vpop.f32.mrb[0].mxu0
        %1424 = vdwg.mxu0
        %v1426 = vsel %vm907, %v1327, 0
        %v1429 = vsel %vm1135, %v1331, 0
        %1431 = vmatprep.subr.bf16.mxu0 0
        %1432 = vmatpush1.bf16.msra.mxu0 %v1429
        %1433 = vmatprep.subr.bf16.mxu0 0
        %1434 = vmatpush1.bf16.msra.mxu0 0
        %1435 = vmatprep.subr.bf16.mxu0 0
        %1436 = vmatpush1.bf16.msra.mxu0 0
        %1437 = vmatprep.subr.bf16.mxu0 0
        %1438 = vmatpush1.bf16.msra.mxu0 0
        %1439 = vmatprep.subr.bf16.mxu0 0
        %1440 = vmatpush1.bf16.msra.mxu0 0
        %1441 = vmatprep.subr.bf16.mxu0 0
        %1442 = vmatpush1.bf16.msra.mxu0 0
        %1443 = vmatprep.subr.bf16.mxu0 0
        %1444 = vmatpush1.bf16.msra.mxu0 0
        %1445 = vmatprep.subr.bf16.mxu0 0
        %1446 = vmatpush1.bf16.msra.mxu0 0
        %1447 = vmatprep.subr.bf16.mxu0 0
        %1448 = vmatpush1.bf16.msra.mxu0 0
        %1449 = vmatprep.subr.bf16.mxu0 0
        %1450 = vmatpush1.bf16.msra.mxu0 0
        %1451 = vmatprep.subr.bf16.mxu0 0
        %1452 = vmatpush1.bf16.msra.mxu0 0
        %1453 = vmatprep.subr.bf16.mxu0 0
        %1454 = vmatpush1.bf16.msra.mxu0 0
        %1455 = vmatprep.subr.bf16.mxu0 0
        %1456 = vmatpush1.bf16.msra.mxu0 0
        %1457 = vmatprep.subr.bf16.mxu0 0
        %1458 = vmatpush1.bf16.msra.mxu0 0
        %1459 = vmatprep.subr.bf16.mxu0 0
        %1460 = vmatpush1.bf16.msra.mxu0 0
        %1461 = vmatprep.subr.bf16.mxu0 0
        %1462 = vmatpush1.bf16.msra.mxu0 0
        %1463 = vmatprep.mubr.bf16.mxu0 0
        %1464 = vmatmul.mubr.bf16.gmra.mrb[0].mxu0 %v1426
        %v1465 = vpop.f32.mrb[0].mxu0
        %v1466 = vadd.f32 0.0, %v1465
        %v1467 = vpop.f32.mrb[0].mxu0
        %v1468 = vpop.f32.mrb[0].mxu0
        %v1469 = vpop.f32.mrb[0].mxu0
        %1470 = vdwg.mxu0
        %v1472 = vsel %vm907, %v1328, 0
        %v1475 = vsel %vm1135, %v1332, 0
        %1477 = vmatprep.subr.bf16.mxu0 0
        %1478 = vmatpush1.bf16.msra.mxu0 %v1475
        %1479 = vmatprep.subr.bf16.mxu0 0
        %1480 = vmatpush1.bf16.msra.mxu0 0
        %1481 = vmatprep.subr.bf16.mxu0 0
        %1482 = vmatpush1.bf16.msra.mxu0 0
        %1483 = vmatprep.subr.bf16.mxu0 0
        %1484 = vmatpush1.bf16.msra.mxu0 0
        %1485 = vmatprep.subr.bf16.mxu0 0
        %1486 = vmatpush1.bf16.msra.mxu0 0
        %1487 = vmatprep.subr.bf16.mxu0 0
        %1488 = vmatpush1.bf16.msra.mxu0 0
        %1489 = vmatprep.subr.bf16.mxu0 0
        %1490 = vmatpush1.bf16.msra.mxu0 0
        %1491 = vmatprep.subr.bf16.mxu0 0
        %1492 = vmatpush1.bf16.msra.mxu0 0
        %1493 = vmatprep.subr.bf16.mxu0 0
        %1494 = vmatpush1.bf16.msra.mxu0 0
        %1495 = vmatprep.subr.bf16.mxu0 0
        %1496 = vmatpush1.bf16.msra.mxu0 0
        %1497 = vmatprep.subr.bf16.mxu0 0
        %1498 = vmatpush1.bf16.msra.mxu0 0
        %1499 = vmatprep.subr.bf16.mxu0 0
        %1500 = vmatpush1.bf16.msra.mxu0 0
        %1501 = vmatprep.subr.bf16.mxu0 0
        %1502 = vmatpush1.bf16.msra.mxu0 0
        %1503 = vmatprep.subr.bf16.mxu0 0
        %1504 = vmatpush1.bf16.msra.mxu0 0
        %1505 = vmatprep.subr.bf16.mxu0 0
        %1506 = vmatpush1.bf16.msra.mxu0 0
        %1507 = vmatprep.subr.bf16.mxu0 0
        %1508 = vmatpush1.bf16.msra.mxu0 0
        %1509 = vmatprep.mubr.bf16.mxu0 0
        %1510 = vmatmul.mubr.bf16.gmra.mrb[0].mxu0 %v1472
        %v1511 = vpop.f32.mrb[0].mxu0
        %v1512 = vadd.f32 0.0, %v1511
        %v1513 = vpop.f32.mrb[0].mxu0
        %v1514 = vpop.f32.mrb[0].mxu0
        %v1515 = vpop.f32.mrb[0].mxu0
        %1516 = vdwg.mxu0
        %v1517 = vsel %vm710, %v1374, 0.0
        %v1518 = vsel %vm710, %v1420, 0.0
        %v1519 = vadd.f32 %v1517, %v1518
        %v1520 = vsel %vm710, %v1466, 0.0
        %v1521 = vadd.f32 %v1519, %v1520
        %v1522 = vsel %vm710, %v1512, 0.0
        %v1523 = vadd.f32 %v1521, %v1522
        %v1524 = vld [vmem:[#allocation10] sm:$0x1]
        %v1526 = vlaneseq
        %v1527 = vshrl.u32 %v1526, 7
        %v1528 = vsub.s32 0, %v1527
        %v1529 = vrot.slane %v1524, %v1528
        %v1531 = vadd.f32 %v1523, %v1529
        %v1532 = vadd.f32 %v683, %v1531
        %v1533 = vsel %vm710, %v1532, 0.0
        %1534 = vadd.xlane.f32.xlu0 %v1533
        %v1535 = vpop.xlane.xlu0 %1534
        %v1536 = vrcp.pop 32.0
        %v1537 = vmul.f32 %v1535, %v1536
        %v1538 = vsub.f32 %v1532, %v1537
        %v1539 = vmul.f32 %v1538, %v1538
        %v1540 = vsel %vm710, %v1539, 0.0
        %1541 = vadd.xlane.f32.xlu0 %v1540
        %v1542 = vpop.xlane.xlu0 %1541
        %v1543 = vmul.f32 %v1542, %v1536
        %v1544 = vadd.f32 %v1543, 1e-05
        %v1545 = vrsqrt.pop %v1544
        %v1546 = vmul.f32 %v1538, %v1545
        %v1547 = vld [vmem:[%s14] sm:$0x1]
        %v1549 = vlaneseq
        %v1550 = vshrl.u32 %v1549, 7
        %v1551 = vsub.s32 0, %v1550
        %v1552 = vrot.slane %v1547, %v1551
        %v1554 = vmul.f32 %v1546, %v1552
        %v1555 = vld [vmem:[%s15] sm:$0x1]
        %v1557 = vlaneseq
        %v1558 = vshrl.u32 %v1557, 7
        %v1559 = vsub.s32 0, %v1558
        %v1560 = vrot.slane %v1555, %v1559
        %v1562 = vadd.f32 %v1554, %v1560
        %v1563 = vpack.c.bf16 %v1562, %v1562
        %v1564 = vld [vmem:[%s10] sm:$0xf]
        %v1565 = vld [vmem:[%s10 + $0x4] sm:$0xf]
        %v1566 = vld [vmem:[%s10 + $0x8] sm:$0xf]
        %v1567 = vld [vmem:[%s10 + $0xc] sm:$0xf]
        %v1568 = vld [vmem:[%s11] sm:$0x1]
        %v1570 = vlaneseq
        %v1571 = vshrl.u32 %v1570, 7
        %v1572 = vsub.s32 0, %v1571
        %v1573 = vrot.slane %v1568, %v1572
        %v1579 = vunpack.c.l.b16 %v1564
        %v1580 = vunpack.c.l.b16 %v1565
        %v1581 = vunpack.c.l.b16 %v1566
        %v1582 = vunpack.c.l.b16 %v1567
        %v1583 = vpack.c.b16 %v1580, %v1579
        %v1584 = vpack.c.b16 %v1582, %v1581
        %v1588 = vsel %vm710, %v1563, 0
        %1590 = vmatprep.subr.bf16.mxu0 0
        %1591 = vmatpush1.bf16.msra.mxu0 %v1583
        %1592 = vmatprep.subr.bf16.mxu0 0
        %1593 = vmatpush1.bf16.msra.mxu0 %v1584
        %1594 = vmatprep.subr.bf16.mxu0 0
        %1595 = vmatpush1.bf16.msra.mxu0 0
        %1596 = vmatprep.subr.bf16.mxu0 0
        %1597 = vmatpush1.bf16.msra.mxu0 0
        %1598 = vmatprep.subr.bf16.mxu0 0
        %1599 = vmatpush1.bf16.msra.mxu0 0
        %1600 = vmatprep.subr.bf16.mxu0 0
        %1601 = vmatpush1.bf16.msra.mxu0 0
        %1602 = vmatprep.subr.bf16.mxu0 0
        %1603 = vmatpush1.bf16.msra.mxu0 0
        %1604 = vmatprep.subr.bf16.mxu0 0
        %1605 = vmatpush1.bf16.msra.mxu0 0
        %1606 = vmatprep.subr.bf16.mxu0 0
        %1607 = vmatpush1.bf16.msra.mxu0 0
        %1608 = vmatprep.subr.bf16.mxu0 0
        %1609 = vmatpush1.bf16.msra.mxu0 0
        %1610 = vmatprep.subr.bf16.mxu0 0
        %1611 = vmatpush1.bf16.msra.mxu0 0
        %1612 = vmatprep.subr.bf16.mxu0 0
        %1613 = vmatpush1.bf16.msra.mxu0 0
        %1614 = vmatprep.subr.bf16.mxu0 0
        %1615 = vmatpush1.bf16.msra.mxu0 0
        %1616 = vmatprep.subr.bf16.mxu0 0
        %1617 = vmatpush1.bf16.msra.mxu0 0
        %1618 = vmatprep.subr.bf16.mxu0 0
        %1619 = vmatpush1.bf16.msra.mxu0 0
        %1620 = vmatprep.subr.bf16.mxu0 0
        %1621 = vmatpush1.bf16.msra.mxu0 0
        %1622 = vmatprep.mubr.bf16.mxu0 0
        %1623 = vmatmul.mubr.bf16.gmra.mrb[0].mxu0 %v1588
        %v1624 = vpop.f32.mrb[0].mxu0
        %v1625 = vadd.f32 %v1573, %v1624
        %v1626 = vpop.f32.mrb[0].mxu0
        %v1627 = vpop.f32.mrb[0].mxu0
        %v1628 = vpop.f32.mrb[0].mxu0
        %1629 = vdwg.mxu0
        %v1630 = vmax.f32 %v1625, 0.0
        %v1631 = vpack.c.bf16 %v1630, %v1630
        %v1632 = vld [vmem:[%s12] sm:$0xf]
        %v1633 = vld [vmem:[%s12 + $0x4] sm:$0xf]
        %v1634 = vld [vmem:[%s12 + $0x8] sm:$0xf]
        %v1635 = vld [vmem:[%s12 + $0xc] sm:$0xf]
        %v1636 = vld [vmem:[%s12 + $0x10] sm:$0xf]
        %v1637 = vld [vmem:[%s12 + $0x14] sm:$0xf]
        %v1638 = vld [vmem:[%s12 + $0x18] sm:$0xf]
        %v1639 = vld [vmem:[%s12 + $0x1c] sm:$0xf]
        %v1640 = vld [vmem:[%s13] sm:$0x1]
        %v1642 = vlaneseq
        %v1643 = vshrl.u32 %v1642, 7
        %v1644 = vsub.s32 0, %v1643
        %v1645 = vrot.slane %v1640, %v1644
        %v1655 = vunpack.c.l.b16 %v1632
        %v1656 = vunpack.c.l.b16 %v1633
        %v1657 = vunpack.c.l.b16 %v1634
        %v1658 = vunpack.c.l.b16 %v1635
        %v1659 = vunpack.c.l.b16 %v1636
        %v1660 = vunpack.c.l.b16 %v1637
        %v1661 = vunpack.c.l.b16 %v1638
        %v1662 = vunpack.c.l.b16 %v1639
        %v1663 = vpack.c.b16 %v1656, %v1655
        %v1664 = vpack.c.b16 %v1658, %v1657
        %v1665 = vpack.c.b16 %v1660, %v1659
        %v1666 = vpack.c.b16 %v1662, %v1661
        %vm1671 = vcmask 523264
        %v1673 = vsel %vm1671, %v1631, 0
        %1675 = vmatprep.subr.bf16.mxu0 0
        %1676 = vmatpush1.bf16.msra.mxu0 %v1663
        %1677 = vmatprep.subr.bf16.mxu0 0
        %1678 = vmatpush1.bf16.msra.mxu0 %v1664
        %1679 = vmatprep.subr.bf16.mxu0 0
        %1680 = vmatpush1.bf16.msra.mxu0 %v1665
        %1681 = vmatprep.subr.bf16.mxu0 0
        %1682 = vmatpush1.bf16.msra.mxu0 %v1666
        %1683 = vmatprep.subr.bf16.mxu0 0
        %1684 = vmatpush1.bf16.msra.mxu0 0
        %1685 = vmatprep.subr.bf16.mxu0 0
        %1686 = vmatpush1.bf16.msra.mxu0 0
        %1687 = vmatprep.subr.bf16.mxu0 0
        %1688 = vmatpush1.bf16.msra.mxu0 0
        %1689 = vmatprep.subr.bf16.mxu0 0
        %1690 = vmatpush1.bf16.msra.mxu0 0
        %1691 = vmatprep.subr.bf16.mxu0 0
        %1692 = vmatpush1.bf16.msra.mxu0 0
        %1693 = vmatprep.subr.bf16.mxu0 0
        %1694 = vmatpush1.bf16.msra.mxu0 0
        %1695 = vmatprep.subr.bf16.mxu0 0
        %1696 = vmatpush1.bf16.msra.mxu0 0
        %1697 = vmatprep.subr.bf16.mxu0 0
        %1698 = vmatpush1.bf16.msra.mxu0 0
        %1699 = vmatprep.subr.bf16.mxu0 0
        %1700 = vmatpush1.bf16.msra.mxu0 0
        %1701 = vmatprep.subr.bf16.mxu0 0
        %1702 = vmatpush1.bf16.msra.mxu0 0
        %1703 = vmatprep.subr.bf16.mxu0 0
        %1704 = vmatpush1.bf16.msra.mxu0 0
        %1705 = vmatprep.subr.bf16.mxu0 0
        %1706 = vmatpush1.bf16.msra.mxu0 0
        %1707 = vmatprep.mubr.bf16.mxu0 0
        %1708 = vmatmul.mubr.bf16.gmra.mrb[0].mxu0 %v1673
        %v1709 = vpop.f32.mrb[0].mxu0
        %v1710 = vadd.f32 %v1645, %v1709
        %v1711 = vpop.f32.mrb[0].mxu0
        %v1712 = vpop.f32.mrb[0].mxu0
        %v1713 = vpop.f32.mrb[0].mxu0
        %1714 = vdwg.mxu0
        %v1715 = vadd.f32 %v1562, %v1710
        %v1716 = vsel %vm710, %v1715, 0.0
        %1717 = vadd.xlane.f32.xlu0 %v1716
        %v1718 = vpop.xlane.xlu0 %1717
        %v1719 = vmul.f32 %v1718, %v1536
        %v1720 = vsub.f32 %v1715, %v1719
        %v1721 = vmul.f32 %v1720, %v1720
        %v1722 = vsel %vm710, %v1721, 0.0
        %1723 = vadd.xlane.f32.xlu0 %v1722
        %v1724 = vpop.xlane.xlu0 %1723
        %v1725 = vmul.f32 %v1724, %v1536
        %v1726 = vadd.f32 %v1725, 1e-05
        %v1727 = vrsqrt.pop %v1726
        %v1728 = vmul.f32 %v1720, %v1727
        %v1729 = vld [vmem:[%s16] sm:$0x1]
        %v1731 = vlaneseq
        %v1732 = vshrl.u32 %v1731, 7
        %v1733 = vsub.s32 0, %v1732
        %v1734 = vrot.slane %v1729, %v1733
        %v1736 = vmul.f32 %v1728, %v1734
        %v1737 = vld [vmem:[%s17] sm:$0x1]
        %v1739 = vlaneseq
        %v1740 = vshrl.u32 %v1739, 7
        %v1741 = vsub.s32 0, %v1740
        %v1742 = vrot.slane %v1737, %v1741
        %v1744 = vadd.f32 %v1736, %v1742
        %1745 = vst.msk [vmem:[%s670] sm:$0xff] %vm710, %v1744
        %s1746 = sand.u32 %s447, 1
        %s1747 = scalar_lea.sflag [#allocation4], %s1746
        %s1748 = sand.u32 %s447, 1
        %s1749 = smul.addr %s1748, 8
        %s1750 = scalar_lea.vmem [#allocation11], %s1749
        // Predicated region
        $region113: #{tpu_custom_call.1} parent=91 // pred_check
          %p1751 = pneg %p457
        $region114: #{tpu_custom_call.1} parent=91 // pred_check_branch
          %1753 = sbr.rel (%p1751) target = $region116
        $region115: #{tpu_custom_call.1} parent=91 // pred_region
          %s1755 = ssub.s32 128, 128
          %1756 = vsyncadd %s1747, %s1755
          %s1757 = sadd.s32 %s40, %s39
          %s1758 = smul.addr %s1757, 128
          %s1759 = scalar_lea.hbm %s18, %s1758
          %s1761 = sshll.u32 %s1750, 4
          %s1762 = int_to_ptr.vmem [resolvable:$true] %s1761
          %1764 = dma.vmem_to_hbm [thread:$0]  %s1762, 128, %s1759, %s1747
        $region116: #{tpu_custom_call.1} parent=91 // pred_fallthru
          _
      $region92: #{tpu_custom_call.1} parent=5 // pred_fallthru
        _
      %p1765 = scmp.le.s32.totalorder 2, %s30
      // Predicated region
      $region117: #{tpu_custom_call.1} parent=5 // pred_check
        %p1766 = pneg %p1765
      $region118: #{tpu_custom_call.1} parent=5 // pred_check_branch
        %1768 = sbr.rel (%p1766) target = $region120
      $region119: #{tpu_custom_call.1} parent=5 // pred_region
        %s1769 = ssub.s32 %s30, 2
        // Predicated region
        $region121: #{tpu_custom_call.1} parent=119 // pred_check
          %p1770 = pneg %p463
        $region122: #{tpu_custom_call.1} parent=119 // pred_check_branch
          %1772 = sbr.rel (%p1770) target = $region124
        $region123: #{tpu_custom_call.1} parent=119 // pred_region
          %s1773 = sand.u32 %s448, 1
          %s1774 = scalar_lea.sflag [#allocation4], %s1773
          %s1775 = sand.u32 %s448, 1
          %s1776 = smul.addr %s1775, 8
          %s1777 = scalar_lea.vmem [#allocation11], %s1776
          %1778 = dma.done %s1774, 128
        $region124: #{tpu_custom_call.1} parent=119 // pred_fallthru
          _
      $region120: #{tpu_custom_call.1} parent=5 // pred_fallthru
        _
    $region6: #{tpu_custom_call.1} parent=1 // loop_footer
      %s34 = sadd.s32 1, %s30
    $region7: #{tpu_custom_call.1} parent=1 // loop_footer_branch
      %29 = sbr.rel target = $region3
    $region8: #{tpu_custom_call.1} parent=1 // loop_exit
      _
    %1779 = vsyncpa [#allocation3], 1
    %s1780 = scalar_lea.sflag [#allocation3], 1
    %1781 = vsyncpa %s1780, 1
    %1782 = vsyncpa [#allocation6], 1
    %1783 = vsyncpa [#allocation9], 1
    %1784 = vsyncpa [#allocation4], 1
    %s1785 = scalar_lea.sflag [#allocation4], 1
    %1786 = vsyncpa %s1785, 1

</llo_original>
